<compile_context>
chip_gen: v5e
topology: v5e:2x2
jax: 0.10.0
libtpu: 0.0.40
codegen_flags: <defaults>
</compile_context>

<pallas_src>
import functools

import jax
import jax.numpy as jnp
from jax.experimental import pallas as pl
from jax.experimental.pallas import tpu as pltpu


def _pick_batch_tile(n, hw, max_lanes=4096):
    """Largest divisor of n with nb*hw <= max_lanes (at least 1)."""
    nb = 1
    for cand in range(1, n + 1):
        if n % cand == 0 and cand * hw <= max_lanes:
            nb = cand
    return nb


def _border_masks(H, W, nb):
    """(9, nb*H*W) f32 validity masks for the 9 conv taps, tiled per image."""
    HW = H * W
    p = jnp.arange(HW, dtype=jnp.int32)
    r, c = p // W, p % W
    rows = []
    for k in range(9):
        dh, dw = k // 3 - 1, k % 3 - 1
        m = (r + dh >= 0) & (r + dh < H) & (c + dw >= 0) & (c + dw < W)
        rows.append(m.astype(jnp.float32))
    return jnp.tile(jnp.stack(rows, 0), (1, nb))        # (9, nb*HW)


def _scn_kernel(x_ref, c1_ref, c2_ref, mask_ref, *rest,
                H, W, layer_num, channel_size, nb):
    o_ref = rest[-1]
    w_refs = rest[:-1]
    w0_ref, b0_ref = w_refs[0], w_refs[1]              # (Cs, 9), (Cs, 1)
    wl_ref, bl_ref = w_refs[-2], w_refs[-1]            # (Cs, 9), (1, 1)
    mid_refs = w_refs[2:-2]                            # pairs (Cs, 9*Cs), (Cs, 1)

    HW = H * W
    NHW = nb * HW
    Cs = channel_size

    def taps_of(act):
        """9 spatially shifted, border-masked copies of act (C, nb*HW)."""
        taps = []
        for k in range(9):
            dh, dw = k // 3 - 1, k % 3 - 1
            off = dh * W + dw
            rolled = act if off == 0 else pltpu.roll(
                act, shift=(-off) % NHW, axis=1)
            taps.append(rolled * mask_ref[k:k + 1, :])  # (C, NHW)
        return taps

    # Cmul #1 (per-pixel weight, tiled over the nb packed images).
    act = x_ref[0] * c1_ref[...]                        # (1, NHW)

    # conv0: 1 -> Cs, + ReLU.  VPU outer product (K would only be 9 on the MXU).
    w0 = w0_ref[...]                                    # (Cs, 9)
    t = taps_of(act)
    y = jnp.zeros((Cs, NHW), jnp.float32)
    for k in range(9):
        y = y + w0[:, k:k + 1] * t[k]                   # (Cs,1)*(1,NHW)
    y = jnp.maximum(y + b0_ref[...], 0.0)               # (Cs, NHW)

    # conv1 .. conv_{L-2}: Cs -> Cs, + ReLU.  One MXU matmul each (K = 9*Cs).
    for li in range(layer_num - 2):
        wm_ref, bm_ref = mid_refs[2 * li], mid_refs[2 * li + 1]
        t = taps_of(y)
        stack = jnp.concatenate(t, axis=0)              # (9*Cs, NHW)
        y = jnp.dot(wm_ref[...], stack, preferred_element_type=jnp.float32)
        y = jnp.maximum(y + bm_ref[...], 0.0)           # (Cs, NHW)

    # conv_{L-1}: Cs -> 1, no ReLU.  VPU muls + XLU sublane reduce (M would be 1).
    wl = wl_ref[...]                                    # (Cs, 9)
    t = taps_of(y)
    acc = jnp.zeros((Cs, NHW), jnp.float32)
    for k in range(9):
        acc = acc + wl[:, k:k + 1] * t[k]
    out = jnp.sum(acc, axis=0, keepdims=True) + bl_ref[...]   # (1, NHW)

    # Cmul #2 and lane-dense store (last dim = nb*HW).
    o_ref[0] = (out * c2_ref[...]).astype(o_ref.dtype)


def scn_forward(x, params, cbsize, batch_tile=None):
    H, W = cbsize
    HW = H * W
    N = x.shape[0]
    L = len(params["w_mid"]) + 2
    Cs = params["w_first"].shape[0]

    nb = batch_tile if batch_tile is not None else _pick_batch_tile(N, HW)
    assert N % nb == 0
    NHW = nb * HW
    num_tiles = N // nb

    # Pack nb images per grid step along the lane axis.
    x3 = x.astype(jnp.float32).reshape(num_tiles, 1, NHW)
    c1t = jnp.tile(params["c1_w"].reshape(1, HW), (1, nb))      # (1, NHW)
    c2t = jnp.tile(params["c2_w"].reshape(1, HW), (1, nb))      # (1, NHW)
    masks = _border_masks(H, W, nb)                             # (9, NHW)

    weights = [params["w_first"], params["b_first"]]
    for i in range(L - 2):
        weights += [params["w_mid"][i], params["b_mid"][i]]
    weights += [params["w_last"], params["b_last"]]

    def const_spec(a):
        return pl.BlockSpec(a.shape, lambda n: (0,) * a.ndim)

    kernel = functools.partial(_scn_kernel, H=H, W=W, layer_num=L,
                               channel_size=Cs, nb=nb)
    out = pl.pallas_call(
        kernel,
        out_shape=jax.ShapeDtypeStruct((num_tiles, 1, NHW), jnp.float32),
        grid=(num_tiles,),
        in_specs=[pl.BlockSpec((1, 1, NHW), lambda n: (n, 0, 0)),
                  const_spec(c1t), const_spec(c2t), const_spec(masks)]
                 + [const_spec(a) for a in weights],
        out_specs=pl.BlockSpec((1, 1, NHW), lambda n: (n, 0, 0)),
        compiler_params=pltpu.CompilerParams(dimension_semantics=("parallel",)),
    )(x3, c1t, c2t, masks, *weights)
    return out.reshape(N, HW)


# ----------------------------------------------------------------------------
# Deterministic synthetic parameter init (shapes from SCN.__init__) + packing.
# ----------------------------------------------------------------------------
def init_params(key, layer_num, channel_size, cbsize):
    H, W = cbsize
    key, k1, k2 = jax.random.split(key, 3)
    # Module init uses ones for Cmul; random here so the check is non-trivial.
    c1_w = jax.random.uniform(k1, (1, H * W), jnp.float32, 0.5, 1.5)
    c2_w = jax.random.uniform(k2, (1, H * W), jnp.float32, 0.5, 1.5)

    chans = [1] + [channel_size] * (layer_num - 1) + [1]
    conv_w_oihw, conv_b = [], []
    for i in range(layer_num):
        cin, cout = chans[i], chans[i + 1]
        key, kw, kb = jax.random.split(key, 3)
        bound = 1.0 / float(jnp.sqrt(cin * 9.0))
        conv_w_oihw.append(
            jax.random.uniform(kw, (cout, cin, 3, 3), jnp.float32, -bound, bound))
        conv_b.append(jax.random.uniform(kb, (cout,), jnp.float32, -bound, bound))

    # Pack for the fused kernel.
    w_first = conv_w_oihw[0].reshape(channel_size, 9)            # (Cs, 9)
    b_first = conv_b[0].reshape(channel_size, 1)
    w_mid, b_mid = [], []
    for i in range(1, layer_num - 1):
        w = conv_w_oihw[i]                                       # (Cs, Cs, 3, 3)
        w_mid.append(jnp.transpose(w, (0, 2, 3, 1))
                     .reshape(channel_size, 9 * channel_size))   # (Cs, 9*Cs)
        b_mid.append(conv_b[i].reshape(channel_size, 1))
    w_last = conv_w_oihw[-1][0].reshape(channel_size, 9)         # (Cs, 9)
    b_last = conv_b[-1].reshape(1, 1)

    params = dict(c1_w=c1_w, c2_w=c2_w, w_first=w_first, b_first=b_first,
                  w_mid=w_mid, b_mid=b_mid, w_last=w_last, b_last=b_last)
    ref_params = dict(c1_w=c1_w.reshape(1, H, W), c2_w=c2_w.reshape(1, H, W),
                      conv_w_oihw=conv_w_oihw, conv_b=conv_b)
    return params, ref_params


# Pure-JAX reference (NCHW, matching PyTorch semantics) for correctness check.
def scn_reference(x, ref_params, cbsize):
    H, W = cbsize
    y = x.reshape(-1, H, W) * ref_params["c1_w"]
    y = y[:, None, :, :]
    L = len(ref_params["conv_w_oihw"])
    for i in range(L):
        y = jax.lax.conv_general_dilated(
            y, ref_params["conv_w_oihw"][i], (1, 1), "SAME",
            dimension_numbers=("NCHW", "OIHW", "NCHW"))
        y = y + ref_params["conv_b"][i].reshape(1, -1, 1, 1)
        if i < L - 1:
            y = jnp.maximum(y, 0.0)
    y = y[:, 0, :, :] * ref_params["c2_w"]
    return y.reshape(-1, H * W)


if __name__ == "__main__":
    layer_num, channel_size, cbsize = 3, 8, (16, 16)
    batch = 2

    key = jax.random.PRNGKey(0)
    kx, kp = jax.random.split(key)
    x = jax.random.normal(kx, (batch, cbsize[0] * cbsize[1]), jnp.float32)

    params, ref_params = init_params(kp, layer_num, channel_size, cbsize)

    out = jax.block_until_ready(scn_forward(x, params, cbsize))
    assert out.shape == (batch, cbsize[0] * cbsize[1]), out.shape

    ref = scn_reference(x, ref_params, cbsize)
    if not jnp.allclose(out, ref, atol=1e-4, rtol=1e-4):
        raise AssertionError(
            f"mismatch: max abs err {float(jnp.max(jnp.abs(out - ref)))}")

    print("KERNEL_OK")
</pallas_src>

<mosaic_0001>
module attributes {stable_mosaic.version = 11 : i64} {
  func.func @_scn_kernel(%arg0: i32, %arg1: memref<1x1x512xf32, #tpu.memory_space<vmem>>, %arg2: memref<1x512xf32, #tpu.memory_space<vmem>>, %arg3: memref<1x512xf32, #tpu.memory_space<vmem>>, %arg4: memref<9x512xf32, #tpu.memory_space<vmem>>, %arg5: memref<8x9xf32, #tpu.memory_space<vmem>>, %arg6: memref<8x1xf32, #tpu.memory_space<vmem>>, %arg7: memref<8x72xf32, #tpu.memory_space<vmem>>, %arg8: memref<8x1xf32, #tpu.memory_space<vmem>>, %arg9: memref<8x9xf32, #tpu.memory_space<vmem>>, %arg10: memref<1x1xf32, #tpu.memory_space<vmem>>, %arg11: memref<1x1x512xf32, #tpu.memory_space<vmem>>) attributes {dimension_semantics = [#tpu.dimension_semantics<parallel>], iteration_bounds = array<i64: 1>, scalar_prefetch = 0 : i64, scratch_operands = 0 : i64, tpu.core_type = #tpu.core_type<tc>, window_params = [{transform_indices = @transform_0, window_bounds = array<i64: 1, 1, 512>}, {pipeline_mode = #tpu.pipeline_mode<synchronous>, transform_indices = @transform_1, window_bounds = array<i64: 1, 512>}, {pipeline_mode = #tpu.pipeline_mode<synchronous>, transform_indices = @transform_2, window_bounds = array<i64: 1, 512>}, {pipeline_mode = #tpu.pipeline_mode<synchronous>, transform_indices = @transform_3, window_bounds = array<i64: 9, 512>}, {pipeline_mode = #tpu.pipeline_mode<synchronous>, transform_indices = @transform_4, window_bounds = array<i64: 8, 9>}, {pipeline_mode = #tpu.pipeline_mode<synchronous>, transform_indices = @transform_5, window_bounds = array<i64: 8, 1>}, {pipeline_mode = #tpu.pipeline_mode<synchronous>, transform_indices = @transform_6, window_bounds = array<i64: 8, 72>}, {pipeline_mode = #tpu.pipeline_mode<synchronous>, transform_indices = @transform_7, window_bounds = array<i64: 8, 1>}, {pipeline_mode = #tpu.pipeline_mode<synchronous>, transform_indices = @transform_8, window_bounds = array<i64: 8, 9>}, {pipeline_mode = #tpu.pipeline_mode<synchronous>, transform_indices = @transform_9, window_bounds = array<i64: 1, 1>}, {transform_indices = @transform_10, window_bounds = array<i64: 1, 1, 512>}]} {
    %c0 = arith.constant 0 : index
    %c0_0 = arith.constant 0 : index
    %c0_1 = arith.constant 0 : index
    %0 = vector.load %arg1[%c0, %c0_0, %c0_1] : memref<1x1x512xf32, #tpu.memory_space<vmem>>, vector<1x1x512xf32>
    %1 = vector.shape_cast %0 : vector<1x1x512xf32> to vector<1x512xf32>
    %c0_2 = arith.constant 0 : index
    %c0_3 = arith.constant 0 : index
    %2 = vector.load %arg2[%c0_2, %c0_3] : memref<1x512xf32, #tpu.memory_space<vmem>>, vector<1x512xf32>
    %3 = arith.mulf %1, %2 : vector<1x512xf32>
    %c0_4 = arith.constant 0 : index
    %c0_5 = arith.constant 0 : index
    %4 = vector.load %arg5[%c0_4, %c0_5] : memref<8x9xf32, #tpu.memory_space<vmem>>, vector<8x9xf32>
    %c17_i32 = arith.constant 17 : i32
    %5 = tpu.dynamic_rotate %3 by %c17_i32 dim 1 : vector<1x512xf32>, i32 -> vector<1x512xf32>
    %c0_6 = arith.constant 0 : index
    %c0_7 = arith.constant 0 : index
    %6 = vector.load %arg4[%c0_6, %c0_7] : memref<9x512xf32, #tpu.memory_space<vmem>>, vector<1x512xf32>
    %7 = arith.mulf %5, %6 : vector<1x512xf32>
    %c16_i32 = arith.constant 16 : i32
    %8 = tpu.dynamic_rotate %3 by %c16_i32 dim 1 : vector<1x512xf32>, i32 -> vector<1x512xf32>
    %c1 = arith.constant 1 : index
    %c0_8 = arith.constant 0 : index
    %9 = vector.load %arg4[%c1, %c0_8] : memref<9x512xf32, #tpu.memory_space<vmem>>, vector<1x512xf32>
    %10 = arith.mulf %8, %9 : vector<1x512xf32>
    %c15_i32 = arith.constant 15 : i32
    %11 = tpu.dynamic_rotate %3 by %c15_i32 dim 1 : vector<1x512xf32>, i32 -> vector<1x512xf32>
    %c2 = arith.constant 2 : index
    %c0_9 = arith.constant 0 : index
    %12 = vector.load %arg4[%c2, %c0_9] : memref<9x512xf32, #tpu.memory_space<vmem>>, vector<1x512xf32>
    %13 = arith.mulf %11, %12 : vector<1x512xf32>
    %c1_i32 = arith.constant 1 : i32
    %14 = tpu.dynamic_rotate %3 by %c1_i32 dim 1 : vector<1x512xf32>, i32 -> vector<1x512xf32>
    %c3 = arith.constant 3 : index
    %c0_10 = arith.constant 0 : index
    %15 = vector.load %arg4[%c3, %c0_10] : memref<9x512xf32, #tpu.memory_space<vmem>>, vector<1x512xf32>
    %16 = arith.mulf %14, %15 : vector<1x512xf32>
    %c4 = arith.constant 4 : index
    %c0_11 = arith.constant 0 : index
    %17 = vector.load %arg4[%c4, %c0_11] : memref<9x512xf32, #tpu.memory_space<vmem>>, vector<1x512xf32>
    %18 = arith.mulf %3, %17 : vector<1x512xf32>
    %c511_i32 = arith.constant 511 : i32
    %19 = tpu.dynamic_rotate %3 by %c511_i32 dim 1 : vector<1x512xf32>, i32 -> vector<1x512xf32>
    %c5 = arith.constant 5 : index
    %c0_12 = arith.constant 0 : index
    %20 = vector.load %arg4[%c5, %c0_12] : memref<9x512xf32, #tpu.memory_space<vmem>>, vector<1x512xf32>
    %21 = arith.mulf %19, %20 : vector<1x512xf32>
    %c497_i32 = arith.constant 497 : i32
    %22 = tpu.dynamic_rotate %3 by %c497_i32 dim 1 : vector<1x512xf32>, i32 -> vector<1x512xf32>
    %c6 = arith.constant 6 : index
    %c0_13 = arith.constant 0 : index
    %23 = vector.load %arg4[%c6, %c0_13] : memref<9x512xf32, #tpu.memory_space<vmem>>, vector<1x512xf32>
    %24 = arith.mulf %22, %23 : vector<1x512xf32>
    %c496_i32 = arith.constant 496 : i32
    %25 = tpu.dynamic_rotate %3 by %c496_i32 dim 1 : vector<1x512xf32>, i32 -> vector<1x512xf32>
    %c7 = arith.constant 7 : index
    %c0_14 = arith.constant 0 : index
    %26 = vector.load %arg4[%c7, %c0_14] : memref<9x512xf32, #tpu.memory_space<vmem>>, vector<1x512xf32>
    %27 = arith.mulf %25, %26 : vector<1x512xf32>
    %c495_i32 = arith.constant 495 : i32
    %28 = tpu.dynamic_rotate %3 by %c495_i32 dim 1 : vector<1x512xf32>, i32 -> vector<1x512xf32>
    %c8 = arith.constant 8 : index
    %c0_15 = arith.constant 0 : index
    %29 = vector.load %arg4[%c8, %c0_15] : memref<9x512xf32, #tpu.memory_space<vmem>>, vector<1x512xf32>
    %30 = arith.mulf %28, %29 : vector<1x512xf32>
    %cst = arith.constant 0.000000e+00 : f32
    %31 = vector.broadcast %cst : f32 to vector<8x512xf32>
    %32 = vector.extract_strided_slice %4 {offsets = [0, 0], sizes = [8, 1], strides = [1, 1]} : vector<8x9xf32> to vector<8x1xf32>
    %33 = vector.broadcast %32 : vector<8x1xf32> to vector<8x512xf32>
    %34 = vector.broadcast %7 : vector<1x512xf32> to vector<8x512xf32>
    %35 = arith.mulf %33, %34 : vector<8x512xf32>
    %36 = arith.addf %31, %35 : vector<8x512xf32>
    %37 = vector.extract_strided_slice %4 {offsets = [0, 1], sizes = [8, 1], strides = [1, 1]} : vector<8x9xf32> to vector<8x1xf32>
    %38 = vector.broadcast %37 : vector<8x1xf32> to vector<8x512xf32>
    %39 = vector.broadcast %10 : vector<1x512xf32> to vector<8x512xf32>
    %40 = arith.mulf %38, %39 : vector<8x512xf32>
    %41 = arith.addf %36, %40 : vector<8x512xf32>
    %42 = vector.extract_strided_slice %4 {offsets = [0, 2], sizes = [8, 1], strides = [1, 1]} : vector<8x9xf32> to vector<8x1xf32>
    %43 = vector.broadcast %42 : vector<8x1xf32> to vector<8x512xf32>
    %44 = vector.broadcast %13 : vector<1x512xf32> to vector<8x512xf32>
    %45 = arith.mulf %43, %44 : vector<8x512xf32>
    %46 = arith.addf %41, %45 : vector<8x512xf32>
    %47 = vector.extract_strided_slice %4 {offsets = [0, 3], sizes = [8, 1], strides = [1, 1]} : vector<8x9xf32> to vector<8x1xf32>
    %48 = vector.broadcast %47 : vector<8x1xf32> to vector<8x512xf32>
    %49 = vector.broadcast %16 : vector<1x512xf32> to vector<8x512xf32>
    %50 = arith.mulf %48, %49 : vector<8x512xf32>
    %51 = arith.addf %46, %50 : vector<8x512xf32>
    %52 = vector.extract_strided_slice %4 {offsets = [0, 4], sizes = [8, 1], strides = [1, 1]} : vector<8x9xf32> to vector<8x1xf32>
    %53 = vector.broadcast %52 : vector<8x1xf32> to vector<8x512xf32>
    %54 = vector.broadcast %18 : vector<1x512xf32> to vector<8x512xf32>
    %55 = arith.mulf %53, %54 : vector<8x512xf32>
    %56 = arith.addf %51, %55 : vector<8x512xf32>
    %57 = vector.extract_strided_slice %4 {offsets = [0, 5], sizes = [8, 1], strides = [1, 1]} : vector<8x9xf32> to vector<8x1xf32>
    %58 = vector.broadcast %57 : vector<8x1xf32> to vector<8x512xf32>
    %59 = vector.broadcast %21 : vector<1x512xf32> to vector<8x512xf32>
    %60 = arith.mulf %58, %59 : vector<8x512xf32>
    %61 = arith.addf %56, %60 : vector<8x512xf32>
    %62 = vector.extract_strided_slice %4 {offsets = [0, 6], sizes = [8, 1], strides = [1, 1]} : vector<8x9xf32> to vector<8x1xf32>
    %63 = vector.broadcast %62 : vector<8x1xf32> to vector<8x512xf32>
    %64 = vector.broadcast %24 : vector<1x512xf32> to vector<8x512xf32>
    %65 = arith.mulf %63, %64 : vector<8x512xf32>
    %66 = arith.addf %61, %65 : vector<8x512xf32>
    %67 = vector.extract_strided_slice %4 {offsets = [0, 7], sizes = [8, 1], strides = [1, 1]} : vector<8x9xf32> to vector<8x1xf32>
    %68 = vector.broadcast %67 : vector<8x1xf32> to vector<8x512xf32>
    %69 = vector.broadcast %27 : vector<1x512xf32> to vector<8x512xf32>
    %70 = arith.mulf %68, %69 : vector<8x512xf32>
    %71 = arith.addf %66, %70 : vector<8x512xf32>
    %72 = vector.extract_strided_slice %4 {offsets = [0, 8], sizes = [8, 1], strides = [1, 1]} : vector<8x9xf32> to vector<8x1xf32>
    %73 = vector.broadcast %72 : vector<8x1xf32> to vector<8x512xf32>
    %74 = vector.broadcast %30 : vector<1x512xf32> to vector<8x512xf32>
    %75 = arith.mulf %73, %74 : vector<8x512xf32>
    %76 = arith.addf %71, %75 : vector<8x512xf32>
    %c0_16 = arith.constant 0 : index
    %c0_17 = arith.constant 0 : index
    %77 = vector.load %arg6[%c0_16, %c0_17] : memref<8x1xf32, #tpu.memory_space<vmem>>, vector<8x1xf32>
    %78 = vector.broadcast %77 : vector<8x1xf32> to vector<8x512xf32>
    %79 = arith.addf %76, %78 : vector<8x512xf32>
    %cst_18 = arith.constant 0.000000e+00 : f32
    %80 = vector.broadcast %cst_18 : f32 to vector<8x512xf32>
    %81 = arith.maximumf %79, %80 : vector<8x512xf32>
    %c17_i32_19 = arith.constant 17 : i32
    %82 = tpu.dynamic_rotate %81 by %c17_i32_19 dim 1 : vector<8x512xf32>, i32 -> vector<8x512xf32>
    %c0_20 = arith.constant 0 : index
    %c0_21 = arith.constant 0 : index
    %83 = vector.load %arg4[%c0_20, %c0_21] : memref<9x512xf32, #tpu.memory_space<vmem>>, vector<1x512xf32>
    %84 = vector.broadcast %83 : vector<1x512xf32> to vector<8x512xf32>
    %85 = arith.mulf %82, %84 : vector<8x512xf32>
    %c16_i32_22 = arith.constant 16 : i32
    %86 = tpu.dynamic_rotate %81 by %c16_i32_22 dim 1 : vector<8x512xf32>, i32 -> vector<8x512xf32>
    %c1_23 = arith.constant 1 : index
    %c0_24 = arith.constant 0 : index
    %87 = vector.load %arg4[%c1_23, %c0_24] : memref<9x512xf32, #tpu.memory_space<vmem>>, vector<1x512xf32>
    %88 = vector.broadcast %87 : vector<1x512xf32> to vector<8x512xf32>
    %89 = arith.mulf %86, %88 : vector<8x512xf32>
    %c15_i32_25 = arith.constant 15 : i32
    %90 = tpu.dynamic_rotate %81 by %c15_i32_25 dim 1 : vector<8x512xf32>, i32 -> vector<8x512xf32>
    %c2_26 = arith.constant 2 : index
    %c0_27 = arith.constant 0 : index
    %91 = vector.load %arg4[%c2_26, %c0_27] : memref<9x512xf32, #tpu.memory_space<vmem>>, vector<1x512xf32>
    %92 = vector.broadcast %91 : vector<1x512xf32> to vector<8x512xf32>
    %93 = arith.mulf %90, %92 : vector<8x512xf32>
    %c1_i32_28 = arith.constant 1 : i32
    %94 = tpu.dynamic_rotate %81 by %c1_i32_28 dim 1 : vector<8x512xf32>, i32 -> vector<8x512xf32>
    %c3_29 = arith.constant 3 : index
    %c0_30 = arith.constant 0 : index
    %95 = vector.load %arg4[%c3_29, %c0_30] : memref<9x512xf32, #tpu.memory_space<vmem>>, vector<1x512xf32>
    %96 = vector.broadcast %95 : vector<1x512xf32> to vector<8x512xf32>
    %97 = arith.mulf %94, %96 : vector<8x512xf32>
    %c4_31 = arith.constant 4 : index
    %c0_32 = arith.constant 0 : index
    %98 = vector.load %arg4[%c4_31, %c0_32] : memref<9x512xf32, #tpu.memory_space<vmem>>, vector<1x512xf32>
    %99 = vector.broadcast %98 : vector<1x512xf32> to vector<8x512xf32>
    %100 = arith.mulf %81, %99 : vector<8x512xf32>
    %c511_i32_33 = arith.constant 511 : i32
    %101 = tpu.dynamic_rotate %81 by %c511_i32_33 dim 1 : vector<8x512xf32>, i32 -> vector<8x512xf32>
    %c5_34 = arith.constant 5 : index
    %c0_35 = arith.constant 0 : index
    %102 = vector.load %arg4[%c5_34, %c0_35] : memref<9x512xf32, #tpu.memory_space<vmem>>, vector<1x512xf32>
    %103 = vector.broadcast %102 : vector<1x512xf32> to vector<8x512xf32>
    %104 = arith.mulf %101, %103 : vector<8x512xf32>
    %c497_i32_36 = arith.constant 497 : i32
    %105 = tpu.dynamic_rotate %81 by %c497_i32_36 dim 1 : vector<8x512xf32>, i32 -> vector<8x512xf32>
    %c6_37 = arith.constant 6 : index
    %c0_38 = arith.constant 0 : index
    %106 = vector.load %arg4[%c6_37, %c0_38] : memref<9x512xf32, #tpu.memory_space<vmem>>, vector<1x512xf32>
    %107 = vector.broadcast %106 : vector<1x512xf32> to vector<8x512xf32>
    %108 = arith.mulf %105, %107 : vector<8x512xf32>
    %c496_i32_39 = arith.constant 496 : i32
    %109 = tpu.dynamic_rotate %81 by %c496_i32_39 dim 1 : vector<8x512xf32>, i32 -> vector<8x512xf32>
    %c7_40 = arith.constant 7 : index
    %c0_41 = arith.constant 0 : index
    %110 = vector.load %arg4[%c7_40, %c0_41] : memref<9x512xf32, #tpu.memory_space<vmem>>, vector<1x512xf32>
    %111 = vector.broadcast %110 : vector<1x512xf32> to vector<8x512xf32>
    %112 = arith.mulf %109, %111 : vector<8x512xf32>
    %c495_i32_42 = arith.constant 495 : i32
    %113 = tpu.dynamic_rotate %81 by %c495_i32_42 dim 1 : vector<8x512xf32>, i32 -> vector<8x512xf32>
    %c8_43 = arith.constant 8 : index
    %c0_44 = arith.constant 0 : index
    %114 = vector.load %arg4[%c8_43, %c0_44] : memref<9x512xf32, #tpu.memory_space<vmem>>, vector<1x512xf32>
    %115 = vector.broadcast %114 : vector<1x512xf32> to vector<8x512xf32>
    %116 = arith.mulf %113, %115 : vector<8x512xf32>
    %117 = tpu.concatenate %85, %89, %93, %97, %100, %104, %108, %112, %116 in 0 : vector<8x512xf32>, vector<8x512xf32>, vector<8x512xf32>, vector<8x512xf32>, vector<8x512xf32>, vector<8x512xf32>, vector<8x512xf32>, vector<8x512xf32>, vector<8x512xf32> -> vector<72x512xf32>
    %c0_45 = arith.constant 0 : index
    %c0_46 = arith.constant 0 : index
    %118 = vector.load %arg7[%c0_45, %c0_46] : memref<8x72xf32, #tpu.memory_space<vmem>>, vector<8x72xf32>
    %cst_47 = arith.constant dense<0.000000e+00> : vector<8x512xf32>
    %119 = tpu.matmul %118, %117, %cst_47 {dimension_numbers = #tpu.dot_dimension_numbers<[1], [0], [0], [1], [0, 0, 1, 1], [], []>} : vector<8x72xf32>, vector<72x512xf32>, vector<8x512xf32> -> vector<8x512xf32>
    %c0_48 = arith.constant 0 : index
    %c0_49 = arith.constant 0 : index
    %120 = vector.load %arg8[%c0_48, %c0_49] : memref<8x1xf32, #tpu.memory_space<vmem>>, vector<8x1xf32>
    %121 = vector.broadcast %120 : vector<8x1xf32> to vector<8x512xf32>
    %122 = arith.addf %119, %121 : vector<8x512xf32>
    %cst_50 = arith.constant 0.000000e+00 : f32
    %123 = vector.broadcast %cst_50 : f32 to vector<8x512xf32>
    %124 = arith.maximumf %122, %123 : vector<8x512xf32>
    %c0_51 = arith.constant 0 : index
    %c0_52 = arith.constant 0 : index
    %125 = vector.load %arg9[%c0_51, %c0_52] : memref<8x9xf32, #tpu.memory_space<vmem>>, vector<8x9xf32>
    %c17_i32_53 = arith.constant 17 : i32
    %126 = tpu.dynamic_rotate %124 by %c17_i32_53 dim 1 : vector<8x512xf32>, i32 -> vector<8x512xf32>
    %c0_54 = arith.constant 0 : index
    %c0_55 = arith.constant 0 : index
    %127 = vector.load %arg4[%c0_54, %c0_55] : memref<9x512xf32, #tpu.memory_space<vmem>>, vector<1x512xf32>
    %128 = vector.broadcast %127 : vector<1x512xf32> to vector<8x512xf32>
    %129 = arith.mulf %126, %128 : vector<8x512xf32>
    %c16_i32_56 = arith.constant 16 : i32
    %130 = tpu.dynamic_rotate %124 by %c16_i32_56 dim 1 : vector<8x512xf32>, i32 -> vector<8x512xf32>
    %c1_57 = arith.constant 1 : index
    %c0_58 = arith.constant 0 : index
    %131 = vector.load %arg4[%c1_57, %c0_58] : memref<9x512xf32, #tpu.memory_space<vmem>>, vector<1x512xf32>
    %132 = vector.broadcast %131 : vector<1x512xf32> to vector<8x512xf32>
    %133 = arith.mulf %130, %132 : vector<8x512xf32>
    %c15_i32_59 = arith.constant 15 : i32
    %134 = tpu.dynamic_rotate %124 by %c15_i32_59 dim 1 : vector<8x512xf32>, i32 -> vector<8x512xf32>
    %c2_60 = arith.constant 2 : index
    %c0_61 = arith.constant 0 : index
    %135 = vector.load %arg4[%c2_60, %c0_61] : memref<9x512xf32, #tpu.memory_space<vmem>>, vector<1x512xf32>
    %136 = vector.broadcast %135 : vector<1x512xf32> to vector<8x512xf32>
    %137 = arith.mulf %134, %136 : vector<8x512xf32>
    %c1_i32_62 = arith.constant 1 : i32
    %138 = tpu.dynamic_rotate %124 by %c1_i32_62 dim 1 : vector<8x512xf32>, i32 -> vector<8x512xf32>
    %c3_63 = arith.constant 3 : index
    %c0_64 = arith.constant 0 : index
    %139 = vector.load %arg4[%c3_63, %c0_64] : memref<9x512xf32, #tpu.memory_space<vmem>>, vector<1x512xf32>
    %140 = vector.broadcast %139 : vector<1x512xf32> to vector<8x512xf32>
    %141 = arith.mulf %138, %140 : vector<8x512xf32>
    %c4_65 = arith.constant 4 : index
    %c0_66 = arith.constant 0 : index
    %142 = vector.load %arg4[%c4_65, %c0_66] : memref<9x512xf32, #tpu.memory_space<vmem>>, vector<1x512xf32>
    %143 = vector.broadcast %142 : vector<1x512xf32> to vector<8x512xf32>
    %144 = arith.mulf %124, %143 : vector<8x512xf32>
    %c511_i32_67 = arith.constant 511 : i32
    %145 = tpu.dynamic_rotate %124 by %c511_i32_67 dim 1 : vector<8x512xf32>, i32 -> vector<8x512xf32>
    %c5_68 = arith.constant 5 : index
    %c0_69 = arith.constant 0 : index
    %146 = vector.load %arg4[%c5_68, %c0_69] : memref<9x512xf32, #tpu.memory_space<vmem>>, vector<1x512xf32>
    %147 = vector.broadcast %146 : vector<1x512xf32> to vector<8x512xf32>
    %148 = arith.mulf %145, %147 : vector<8x512xf32>
    %c497_i32_70 = arith.constant 497 : i32
    %149 = tpu.dynamic_rotate %124 by %c497_i32_70 dim 1 : vector<8x512xf32>, i32 -> vector<8x512xf32>
    %c6_71 = arith.constant 6 : index
    %c0_72 = arith.constant 0 : index
    %150 = vector.load %arg4[%c6_71, %c0_72] : memref<9x512xf32, #tpu.memory_space<vmem>>, vector<1x512xf32>
    %151 = vector.broadcast %150 : vector<1x512xf32> to vector<8x512xf32>
    %152 = arith.mulf %149, %151 : vector<8x512xf32>
    %c496_i32_73 = arith.constant 496 : i32
    %153 = tpu.dynamic_rotate %124 by %c496_i32_73 dim 1 : vector<8x512xf32>, i32 -> vector<8x512xf32>
    %c7_74 = arith.constant 7 : index
    %c0_75 = arith.constant 0 : index
    %154 = vector.load %arg4[%c7_74, %c0_75] : memref<9x512xf32, #tpu.memory_space<vmem>>, vector<1x512xf32>
    %155 = vector.broadcast %154 : vector<1x512xf32> to vector<8x512xf32>
    %156 = arith.mulf %153, %155 : vector<8x512xf32>
    %c495_i32_76 = arith.constant 495 : i32
    %157 = tpu.dynamic_rotate %124 by %c495_i32_76 dim 1 : vector<8x512xf32>, i32 -> vector<8x512xf32>
    %c8_77 = arith.constant 8 : index
    %c0_78 = arith.constant 0 : index
    %158 = vector.load %arg4[%c8_77, %c0_78] : memref<9x512xf32, #tpu.memory_space<vmem>>, vector<1x512xf32>
    %159 = vector.broadcast %158 : vector<1x512xf32> to vector<8x512xf32>
    %160 = arith.mulf %157, %159 : vector<8x512xf32>
    %cst_79 = arith.constant 0.000000e+00 : f32
    %161 = vector.broadcast %cst_79 : f32 to vector<8x512xf32>
    %162 = vector.extract_strided_slice %125 {offsets = [0, 0], sizes = [8, 1], strides = [1, 1]} : vector<8x9xf32> to vector<8x1xf32>
    %163 = vector.broadcast %162 : vector<8x1xf32> to vector<8x512xf32>
    %164 = arith.mulf %163, %129 : vector<8x512xf32>
    %165 = arith.addf %161, %164 : vector<8x512xf32>
    %166 = vector.extract_strided_slice %125 {offsets = [0, 1], sizes = [8, 1], strides = [1, 1]} : vector<8x9xf32> to vector<8x1xf32>
    %167 = vector.broadcast %166 : vector<8x1xf32> to vector<8x512xf32>
    %168 = arith.mulf %167, %133 : vector<8x512xf32>
    %169 = arith.addf %165, %168 : vector<8x512xf32>
    %170 = vector.extract_strided_slice %125 {offsets = [0, 2], sizes = [8, 1], strides = [1, 1]} : vector<8x9xf32> to vector<8x1xf32>
    %171 = vector.broadcast %170 : vector<8x1xf32> to vector<8x512xf32>
    %172 = arith.mulf %171, %137 : vector<8x512xf32>
    %173 = arith.addf %169, %172 : vector<8x512xf32>
    %174 = vector.extract_strided_slice %125 {offsets = [0, 3], sizes = [8, 1], strides = [1, 1]} : vector<8x9xf32> to vector<8x1xf32>
    %175 = vector.broadcast %174 : vector<8x1xf32> to vector<8x512xf32>
    %176 = arith.mulf %175, %141 : vector<8x512xf32>
    %177 = arith.addf %173, %176 : vector<8x512xf32>
    %178 = vector.extract_strided_slice %125 {offsets = [0, 4], sizes = [8, 1], strides = [1, 1]} : vector<8x9xf32> to vector<8x1xf32>
    %179 = vector.broadcast %178 : vector<8x1xf32> to vector<8x512xf32>
    %180 = arith.mulf %179, %144 : vector<8x512xf32>
    %181 = arith.addf %177, %180 : vector<8x512xf32>
    %182 = vector.extract_strided_slice %125 {offsets = [0, 5], sizes = [8, 1], strides = [1, 1]} : vector<8x9xf32> to vector<8x1xf32>
    %183 = vector.broadcast %182 : vector<8x1xf32> to vector<8x512xf32>
    %184 = arith.mulf %183, %148 : vector<8x512xf32>
    %185 = arith.addf %181, %184 : vector<8x512xf32>
    %186 = vector.extract_strided_slice %125 {offsets = [0, 6], sizes = [8, 1], strides = [1, 1]} : vector<8x9xf32> to vector<8x1xf32>
    %187 = vector.broadcast %186 : vector<8x1xf32> to vector<8x512xf32>
    %188 = arith.mulf %187, %152 : vector<8x512xf32>
    %189 = arith.addf %185, %188 : vector<8x512xf32>
    %190 = vector.extract_strided_slice %125 {offsets = [0, 7], sizes = [8, 1], strides = [1, 1]} : vector<8x9xf32> to vector<8x1xf32>
    %191 = vector.broadcast %190 : vector<8x1xf32> to vector<8x512xf32>
    %192 = arith.mulf %191, %156 : vector<8x512xf32>
    %193 = arith.addf %189, %192 : vector<8x512xf32>
    %194 = vector.extract_strided_slice %125 {offsets = [0, 8], sizes = [8, 1], strides = [1, 1]} : vector<8x9xf32> to vector<8x1xf32>
    %195 = vector.broadcast %194 : vector<8x1xf32> to vector<8x512xf32>
    %196 = arith.mulf %195, %160 : vector<8x512xf32>
    %197 = arith.addf %193, %196 : vector<8x512xf32>
    %cst_80 = arith.constant dense<0.000000e+00> : vector<512xf32>
    %198 = vector.multi_reduction <add>, %197, %cst_80 [0] : vector<8x512xf32> to vector<512xf32>
    %199 = vector.shape_cast %198 : vector<512xf32> to vector<1x512xf32>
    %c0_81 = arith.constant 0 : index
    %c0_82 = arith.constant 0 : index
    %200 = vector.load %arg10[%c0_81, %c0_82] : memref<1x1xf32, #tpu.memory_space<vmem>>, vector<1x1xf32>
    %201 = vector.broadcast %200 : vector<1x1xf32> to vector<1x512xf32>
    %202 = arith.addf %199, %201 : vector<1x512xf32>
    %c0_83 = arith.constant 0 : index
    %c0_84 = arith.constant 0 : index
    %203 = vector.load %arg3[%c0_83, %c0_84] : memref<1x512xf32, #tpu.memory_space<vmem>>, vector<1x512xf32>
    %204 = arith.mulf %202, %203 : vector<1x512xf32>
    %c0_85 = arith.constant 0 : index
    %c0_86 = arith.constant 0 : index
    %c0_87 = arith.constant 0 : index
    %205 = vector.load %arg11[%c0_85, %c0_86, %c0_87] : memref<1x1x512xf32, #tpu.memory_space<vmem>>, vector<1x1x512xf32>
    %206 = vector.shape_cast %205 : vector<1x1x512xf32> to vector<1x512xf32>
    %207 = vector.shape_cast %204 : vector<1x512xf32> to vector<1x1x512xf32>
    tpu.vector_store %arg11[%c0_85, %c0_86, %c0_87], %207 {strides = array<i32>} : memref<1x1x512xf32, #tpu.memory_space<vmem>>, vector<1x1x512xf32>,
    return
  }
  func.func @transform_0(%arg0: i32) -> (i32, i32, i32) {
    %c0_i32 = arith.constant 0 : i32
    %c0_i32_0 = arith.constant 0 : i32
    %c0_i32_1 = arith.constant 0 : i32
    return %arg0, %c0_i32, %c0_i32_0 : i32, i32, i32
  }
  func.func @transform_1(%arg0: i32) -> (i32, i32) {
    %c0_i32 = arith.constant 0 : i32
    %c0_i32_0 = arith.constant 0 : i32
    %c0_i32_1 = arith.constant 0 : i32
    return %c0_i32, %c0_i32_0 : i32, i32
  }
  func.func @transform_2(%arg0: i32) -> (i32, i32) {
    %c0_i32 = arith.constant 0 : i32
    %c0_i32_0 = arith.constant 0 : i32
    %c0_i32_1 = arith.constant 0 : i32
    return %c0_i32, %c0_i32_0 : i32, i32
  }
  func.func @transform_3(%arg0: i32) -> (i32, i32) {
    %c0_i32 = arith.constant 0 : i32
    %c0_i32_0 = arith.constant 0 : i32
    %c0_i32_1 = arith.constant 0 : i32
    return %c0_i32, %c0_i32_0 : i32, i32
  }
  func.func @transform_4(%arg0: i32) -> (i32, i32) {
    %c0_i32 = arith.constant 0 : i32
    %c0_i32_0 = arith.constant 0 : i32
    %c0_i32_1 = arith.constant 0 : i32
    return %c0_i32, %c0_i32_0 : i32, i32
  }
  func.func @transform_5(%arg0: i32) -> (i32, i32) {
    %c0_i32 = arith.constant 0 : i32
    %c0_i32_0 = arith.constant 0 : i32
    %c0_i32_1 = arith.constant 0 : i32
    return %c0_i32, %c0_i32_0 : i32, i32
  }
  func.func @transform_6(%arg0: i32) -> (i32, i32) {
    %c0_i32 = arith.constant 0 : i32
    %c0_i32_0 = arith.constant 0 : i32
    %c0_i32_1 = arith.constant 0 : i32
    return %c0_i32, %c0_i32_0 : i32, i32
  }
  func.func @transform_7(%arg0: i32) -> (i32, i32) {
    %c0_i32 = arith.constant 0 : i32
    %c0_i32_0 = arith.constant 0 : i32
    %c0_i32_1 = arith.constant 0 : i32
    return %c0_i32, %c0_i32_0 : i32, i32
  }
  func.func @transform_8(%arg0: i32) -> (i32, i32) {
    %c0_i32 = arith.constant 0 : i32
    %c0_i32_0 = arith.constant 0 : i32
    %c0_i32_1 = arith.constant 0 : i32
    return %c0_i32, %c0_i32_0 : i32, i32
  }
  func.func @transform_9(%arg0: i32) -> (i32, i32) {
    %c0_i32 = arith.constant 0 : i32
    %c0_i32_0 = arith.constant 0 : i32
    %c0_i32_1 = arith.constant 0 : i32
    return %c0_i32, %c0_i32_0 : i32, i32
  }
  func.func @transform_10(%arg0: i32) -> (i32, i32, i32) {
    %c0_i32 = arith.constant 0 : i32
    %c0_i32_0 = arith.constant 0 : i32
    %c0_i32_1 = arith.constant 0 : i32
    return %arg0, %c0_i32, %c0_i32_0 : i32, i32, i32
  }
}

</mosaic_0001>

<llo_original>
// kernel: tpu_custom_call.1
$region0: #{tpu_custom_call.1}
  #allocation0 [shape = 'u32[]', space=smem, size = 0x4, offset = 0x4, fixed_abs, tag = 'smem constant byte address 0x4 - core index']
  #allocation1 [shape = 'u32[72,128]{1,0:T(1,128)}', space=vmem, size = 0x9000, scoped, tag = 'internal scratch']
  #allocation2 [shape = 'f32[1,1]{1,0:T(1,128)S(1)}', space=vmem, size = 0x200, scoped, tag = 'scoped memory for tpu_custom_call.1']
  %s0 = inlined_call_operand.hbm [shape: f32[1,1,512], index: 0, kind: input, shape index: {}]
  %s1 = inlined_call_operand.hbm [shape: f32[1,512], index: 1, kind: input, shape index: {}]
  %s2 = inlined_call_operand.hbm [shape: f32[1,512], index: 2, kind: input, shape index: {}]
  %s3 = inlined_call_operand.hbm [shape: f32[9,512], index: 3, kind: input, shape index: {}]
  %s4 = inlined_call_operand.vmem [shape: f32[8,9], index: 4, kind: input, shape index: {}]
  %s5 = inlined_call_operand.vmem [shape: f32[8,1], index: 5, kind: input, shape index: {}]
  %s6 = inlined_call_operand.vmem [shape: f32[8,72], index: 6, kind: input, shape index: {}]
  %s7 = inlined_call_operand.vmem [shape: f32[8,1], index: 7, kind: input, shape index: {}]
  %s8 = inlined_call_operand.vmem [shape: f32[8,9], index: 8, kind: input, shape index: {}]
  %s9 = inlined_call_operand.<no memory space> [shape: f32[1,1], index: 9, kind: input, shape index: {}]
  %s10 = inlined_call_operand.hbm [shape: f32[1,1,512], index: 10, kind: output, shape index: {}]
  %s11 = sld [smem:[#allocation0]]
  $region66: #{tpu_custom_call.1} parent=0
    _
  %s13 = ssub.s32 1, %s11
  %s14 = scalar_select 0, %s13, %s11
  %v15 = vstv %s9
  %16 = vst [vmem:[#allocation2] sm:$0x1] %v15
  $region1: #{tpu_custom_call.1} parent=0
    #allocation3 [shape = 'u8[2048]{0}', space=vmem, size = 0x800, scoped, tag = 'input window, operand 0, single buffered']
    #allocation4 [shape = 's32[1]{0}', space=sflag, size = 0x4, scoped, tag = 'scoped memory for tpu_custom_call.1']
    #allocation5 [shape = 's32[1]{0}', space=sflag, size = 0x4, scoped, tag = 'scoped memory for tpu_custom_call.1']
    #allocation6 [shape = 'u8[2048]{0}', space=vmem, size = 0x800, scoped, tag = 'input window, operand 1, single buffered']
    #allocation7 [shape = 's32[1]{0}', space=sflag, size = 0x4, scoped, tag = 'scoped memory for tpu_custom_call.1']
    #allocation8 [shape = 'u8[2048]{0}', space=vmem, size = 0x800, scoped, tag = 'input window, operand 2, single buffered']
    #allocation9 [shape = 'u8[32768]{0}', space=vmem, size = 0x8000, scoped, tag = 'input window, operand 3, single buffered']
    #allocation10 [shape = 's32[1]{0}', space=sflag, size = 0x4, scoped, tag = 'scoped memory for tpu_custom_call.1']
    #allocation11 [shape = 'u8[2048]{0}', space=vmem, size = 0x800, scoped, tag = 'output window, operand 0, single buffered']
    %17 = vsyncpa [#allocation4], 0
    %18 = vsyncpa [#allocation7], 0
    %19 = vsyncpa [#allocation10], 0
    %20 = vsyncpa [#allocation5], 0
    // Predicated region
    $region2: #{tpu_custom_call.1} parent=1 // pred_check
      _
    $region3: #{tpu_custom_call.1} parent=1 // pred_check_branch
      %22 = sbr.rel (0) target = $region5
    $region4: #{tpu_custom_call.1} parent=1 // pred_region
      %24 = vsyncadd [#allocation4], 0
      %s26 = sshll.u32 %s0, 4
      %s27 = int_to_ptr.hbm [resolvable:$true] %s26
      %s28 = sshll.u32 [#allocation3], 4
      %s29 = int_to_ptr.vmem [resolvable:$true] %s28
      %31 = dma.hbm_to_vmem [thread:$0]  %s27, 64, %s29, [#allocation4]
    $region5: #{tpu_custom_call.1} parent=1 // pred_fallthru
      _
    // Predicated region
    $region6: #{tpu_custom_call.1} parent=1 // pred_check
      _
    $region7: #{tpu_custom_call.1} parent=1 // pred_check_branch
      %33 = sbr.rel (0) target = $region9
    $region8: #{tpu_custom_call.1} parent=1 // pred_region
      %35 = vsyncadd [#allocation7], 0
      %s37 = sshll.u32 %s1, 4
      %s38 = int_to_ptr.hbm [resolvable:$true] %s37
      %s39 = sshll.u32 [#allocation6], 4
      %s40 = int_to_ptr.vmem [resolvable:$true] %s39
      %42 = dma.hbm_to_vmem [thread:$0]  %s38, 64, %s40, [#allocation7]
    $region9: #{tpu_custom_call.1} parent=1 // pred_fallthru
      _
    // Predicated region
    $region10: #{tpu_custom_call.1} parent=1 // pred_check
      _
    $region11: #{tpu_custom_call.1} parent=1 // pred_check_branch
      %44 = sbr.rel (0) target = $region13
    $region12: #{tpu_custom_call.1} parent=1 // pred_region
      %46 = vsyncadd [#allocation7], 0
      %s48 = sshll.u32 %s2, 4
      %s49 = int_to_ptr.hbm [resolvable:$true] %s48
      %s50 = sshll.u32 [#allocation8], 4
      %s51 = int_to_ptr.vmem [resolvable:$true] %s50
      %53 = dma.hbm_to_vmem [thread:$0]  %s49, 64, %s51, [#allocation7]
    $region13: #{tpu_custom_call.1} parent=1 // pred_fallthru
      _
    // Predicated region
    $region14: #{tpu_custom_call.1} parent=1 // pred_check
      _
    $region15: #{tpu_custom_call.1} parent=1 // pred_check_branch
      %55 = sbr.rel (0) target = $region17
    $region16: #{tpu_custom_call.1} parent=1 // pred_region
      %57 = vsyncadd [#allocation10], 0
      %s58 = sshll.u32 %s3, 4
      %s59 = int_to_ptr.hbm [resolvable:$true] %s58
      %s60 = sshll.u32 [#allocation9], 4
      %s61 = int_to_ptr.vmem [resolvable:$true] %s60
      %66 = dma.hbm_to_vmem [thread:$0]  %s59, 1024, %s61, [#allocation10], 512, 512, 32
    $region17: #{tpu_custom_call.1} parent=1 // pred_fallthru
      _
    // Predicated region
    $region18: #{tpu_custom_call.1} parent=1 // pred_check
      _
    $region19: #{tpu_custom_call.1} parent=1 // pred_check_branch
      %68 = sbr.rel (0) target = $region21
    $region20: #{tpu_custom_call.1} parent=1 // pred_region
      _
    $region21: #{tpu_custom_call.1} parent=1 // pred_fallthru
      _
    // Predicated region
    $region22: #{tpu_custom_call.1} parent=1 // pred_check
      _
    $region23: #{tpu_custom_call.1} parent=1 // pred_check_branch
      %70 = sbr.rel (0) target = $region25
    $region24: #{tpu_custom_call.1} parent=1 // pred_region
      _
    $region25: #{tpu_custom_call.1} parent=1 // pred_fallthru
      _
    // Predicated region
    $region26: #{tpu_custom_call.1} parent=1 // pred_check
      _
    $region27: #{tpu_custom_call.1} parent=1 // pred_check_branch
      %72 = sbr.rel (0) target = $region29
    $region28: #{tpu_custom_call.1} parent=1 // pred_region
      _
    $region29: #{tpu_custom_call.1} parent=1 // pred_fallthru
      _
    // Predicated region
    $region30: #{tpu_custom_call.1} parent=1 // pred_check
      _
    $region31: #{tpu_custom_call.1} parent=1 // pred_check_branch
      %74 = sbr.rel (0) target = $region33
    $region32: #{tpu_custom_call.1} parent=1 // pred_region
      _
    $region33: #{tpu_custom_call.1} parent=1 // pred_fallthru
      _
    // Predicated region
    $region34: #{tpu_custom_call.1} parent=1 // pred_check
      _
    $region35: #{tpu_custom_call.1} parent=1 // pred_check_branch
      %76 = sbr.rel (0) target = $region37
    $region36: #{tpu_custom_call.1} parent=1 // pred_region
      _
    $region37: #{tpu_custom_call.1} parent=1 // pred_fallthru
      _
    // Predicated region
    $region38: #{tpu_custom_call.1} parent=1 // pred_check
      _
    $region39: #{tpu_custom_call.1} parent=1 // pred_check_branch
      %78 = sbr.rel (0) target = $region41
    $region40: #{tpu_custom_call.1} parent=1 // pred_region
      _
    $region41: #{tpu_custom_call.1} parent=1 // pred_fallthru
      _
    // Predicated region
    $region42: #{tpu_custom_call.1} parent=1 // pred_check
      _
    $region43: #{tpu_custom_call.1} parent=1 // pred_check_branch
      %80 = sbr.rel (0) target = $region45
    $region44: #{tpu_custom_call.1} parent=1 // pred_region
      %82 = dma.done [#allocation4], 64
    $region45: #{tpu_custom_call.1} parent=1 // pred_fallthru
      _
    // Predicated region
    $region46: #{tpu_custom_call.1} parent=1 // pred_check
      _
    $region47: #{tpu_custom_call.1} parent=1 // pred_check_branch
      %84 = sbr.rel (0) target = $region49
    $region48: #{tpu_custom_call.1} parent=1 // pred_region
      %86 = dma.done [#allocation7], 64
    $region49: #{tpu_custom_call.1} parent=1 // pred_fallthru
      _
    // Predicated region
    $region50: #{tpu_custom_call.1} parent=1 // pred_check
      _
    $region51: #{tpu_custom_call.1} parent=1 // pred_check_branch
      %88 = sbr.rel (0) target = $region53
    $region52: #{tpu_custom_call.1} parent=1 // pred_region
      %90 = dma.done [#allocation7], 64
    $region53: #{tpu_custom_call.1} parent=1 // pred_fallthru
      _
    // Predicated region
    $region54: #{tpu_custom_call.1} parent=1 // pred_check
      _
    $region55: #{tpu_custom_call.1} parent=1 // pred_check_branch
      %92 = sbr.rel (0) target = $region57
    $region56: #{tpu_custom_call.1} parent=1 // pred_region
      %94 = dma.done [#allocation10], 1024
    $region57: #{tpu_custom_call.1} parent=1 // pred_fallthru
      _
    %v95 = vld [vmem:[#allocation3] sm:$0xf]
    %v96 = vld [vmem:[#allocation6] sm:$0xf]
    %v97 = vmul.f32 %v95, %v96
    %v98 = vld [vmem:[%s4] sm:$0xff]
    %v100 = vperm.slane %v97, 0
    %v101 = vperm.slane %v97, 1
    %v102 = vperm.slane %v97, 2
    %v103 = vperm.slane %v97, 3
    %108 = vrot.lane.b32.xlu0 %v100, 17
    %v109 = vpop.permute.xlu0 %108
    %110 = vrot.lane.b32.xlu0 %v101, 17
    %v111 = vpop.permute.xlu0 %110
    %112 = vrot.lane.b32.xlu0 %v102, 17
    %v113 = vpop.permute.xlu0 %112
    %114 = vrot.lane.b32.xlu0 %v103, 17
    %v115 = vpop.permute.xlu0 %114
    %v116 = vlaneseq
    %v117 = vand.u32 %v116, 127
    %vm118 = vcmp.lt.s32.totalorder %v117, 17
    %v119 = vsel %vm118, %v113, %v115
    %v120 = vsel %vm118, %v111, %v113
    %v121 = vsel %vm118, %v109, %v111
    %v122 = vsel %vm118, %v115, %v109
    %v123 = vld [vmem:[#allocation9] ss:$8 sm:$0xf]
    %v125 = vperm.slane %v123, 0
    %v126 = vperm.slane %v123, 1
    %v127 = vperm.slane %v123, 2
    %v128 = vperm.slane %v123, 3
    %v133 = vmul.f32 %v122, %v125
    %v134 = vmul.f32 %v121, %v126
    %v135 = vmul.f32 %v120, %v127
    %v136 = vmul.f32 %v119, %v128
    %137 = vrot.lane.b32.xlu0 %v100, 16
    %v138 = vpop.permute.xlu0 %137
    %139 = vrot.lane.b32.xlu0 %v101, 16
    %v140 = vpop.permute.xlu0 %139
    %141 = vrot.lane.b32.xlu0 %v102, 16
    %v142 = vpop.permute.xlu0 %141
    %143 = vrot.lane.b32.xlu0 %v103, 16
    %v144 = vpop.permute.xlu0 %143
    %vm145 = vcmp.lt.s32.totalorder %v117, 16
    %v146 = vsel %vm145, %v142, %v144
    %v147 = vsel %vm145, %v140, %v142
    %v148 = vsel %vm145, %v138, %v140
    %v149 = vsel %vm145, %v144, %v138
    %s150 = scalar_lea.vmem [#allocation9], 1
    %v151 = vld [vmem:[%s150] ss:$8 sm:$0xf]
    %v153 = vperm.slane %v151, 0
    %v154 = vperm.slane %v151, 1
    %v155 = vperm.slane %v151, 2
    %v156 = vperm.slane %v151, 3
    %v161 = vmul.f32 %v149, %v153
    %v162 = vmul.f32 %v148, %v154
    %v163 = vmul.f32 %v147, %v155
    %v164 = vmul.f32 %v146, %v156
    %165 = vrot.lane.b32.xlu0 %v100, 15
    %v166 = vpop.permute.xlu0 %165
    %167 = vrot.lane.b32.xlu0 %v101, 15
    %v168 = vpop.permute.xlu0 %167
    %169 = vrot.lane.b32.xlu0 %v102, 15
    %v170 = vpop.permute.xlu0 %169
    %171 = vrot.lane.b32.xlu0 %v103, 15
    %v172 = vpop.permute.xlu0 %171
    %vm173 = vcmp.lt.s32.totalorder %v117, 15
    %v174 = vsel %vm173, %v170, %v172
    %v175 = vsel %vm173, %v168, %v170
    %v176 = vsel %vm173, %v166, %v168
    %v177 = vsel %vm173, %v172, %v166
    %s178 = scalar_lea.vmem [#allocation9], 2
    %v179 = vld [vmem:[%s178] ss:$8 sm:$0xf]
    %v181 = vperm.slane %v179, 0
    %v182 = vperm.slane %v179, 1
    %v183 = vperm.slane %v179, 2
    %v184 = vperm.slane %v179, 3
    %v189 = vmul.f32 %v177, %v181
    %v190 = vmul.f32 %v176, %v182
    %v191 = vmul.f32 %v175, %v183
    %v192 = vmul.f32 %v174, %v184
    %193 = vrot.lane.b32.xlu0 %v100, 1
    %v194 = vpop.permute.xlu0 %193
    %195 = vrot.lane.b32.xlu0 %v101, 1
    %v196 = vpop.permute.xlu0 %195
    %197 = vrot.lane.b32.xlu0 %v102, 1
    %v198 = vpop.permute.xlu0 %197
    %199 = vrot.lane.b32.xlu0 %v103, 1
    %v200 = vpop.permute.xlu0 %199
    %vm201 = vcmp.lt.s32.totalorder %v117, 1
    %v202 = vsel %vm201, %v198, %v200
    %v203 = vsel %vm201, %v196, %v198
    %v204 = vsel %vm201, %v194, %v196
    %v205 = vsel %vm201, %v200, %v194
    %s206 = scalar_lea.vmem [#allocation9], 3
    %v207 = vld [vmem:[%s206] ss:$8 sm:$0xf]
    %v209 = vperm.slane %v207, 0
    %v210 = vperm.slane %v207, 1
    %v211 = vperm.slane %v207, 2
    %v212 = vperm.slane %v207, 3
    %v217 = vmul.f32 %v205, %v209
    %v218 = vmul.f32 %v204, %v210
    %v219 = vmul.f32 %v203, %v211
    %v220 = vmul.f32 %v202, %v212
    %s221 = scalar_lea.vmem [#allocation9], 4
    %v222 = vld [vmem:[%s221] ss:$8 sm:$0xf]
    %v223 = vmul.f32 %v97, %v222
    %224 = vrot.lane.b32.xlu0 %v100, 127
    %v225 = vpop.permute.xlu0 %224
    %226 = vrot.lane.b32.xlu0 %v101, 127
    %v227 = vpop.permute.xlu0 %226
    %228 = vrot.lane.b32.xlu0 %v102, 127
    %v229 = vpop.permute.xlu0 %228
    %230 = vrot.lane.b32.xlu0 %v103, 127
    %v231 = vpop.permute.xlu0 %230
    %vm232 = vcmp.lt.s32.totalorder %v117, 127
    %v233 = vsel %vm232, %v229, %v231
    %v234 = vsel %vm232, %v227, %v229
    %v235 = vsel %vm232, %v225, %v227
    %v236 = vsel %vm232, %v231, %v225
    %s237 = scalar_lea.vmem [#allocation9], 5
    %v238 = vld [vmem:[%s237] ss:$8 sm:$0xf]
    %v240 = vperm.slane %v238, 0
    %v241 = vperm.slane %v238, 1
    %v242 = vperm.slane %v238, 2
    %v243 = vperm.slane %v238, 3
    %v248 = vmul.f32 %v235, %v240
    %v249 = vmul.f32 %v234, %v241
    %v250 = vmul.f32 %v233, %v242
    %v251 = vmul.f32 %v236, %v243
    %252 = vrot.lane.b32.xlu0 %v100, 113
    %v253 = vpop.permute.xlu0 %252
    %254 = vrot.lane.b32.xlu0 %v101, 113
    %v255 = vpop.permute.xlu0 %254
    %256 = vrot.lane.b32.xlu0 %v102, 113
    %v257 = vpop.permute.xlu0 %256
    %258 = vrot.lane.b32.xlu0 %v103, 113
    %v259 = vpop.permute.xlu0 %258
    %vm260 = vcmp.lt.s32.totalorder %v117, 113
    %v261 = vsel %vm260, %v257, %v259
    %v262 = vsel %vm260, %v255, %v257
    %v263 = vsel %vm260, %v253, %v255
    %v264 = vsel %vm260, %v259, %v253
    %s265 = scalar_lea.vmem [#allocation9], 6
    %v266 = vld [vmem:[%s265] ss:$8 sm:$0xf]
    %v268 = vperm.slane %v266, 0
    %v269 = vperm.slane %v266, 1
    %v270 = vperm.slane %v266, 2
    %v271 = vperm.slane %v266, 3
    %v276 = vmul.f32 %v263, %v268
    %v277 = vmul.f32 %v262, %v269
    %v278 = vmul.f32 %v261, %v270
    %v279 = vmul.f32 %v264, %v271
    %280 = vrot.lane.b32.xlu0 %v100, 112
    %v281 = vpop.permute.xlu0 %280
    %282 = vrot.lane.b32.xlu0 %v101, 112
    %v283 = vpop.permute.xlu0 %282
    %284 = vrot.lane.b32.xlu0 %v102, 112
    %v285 = vpop.permute.xlu0 %284
    %286 = vrot.lane.b32.xlu0 %v103, 112
    %v287 = vpop.permute.xlu0 %286
    %vm288 = vcmp.lt.s32.totalorder %v117, 112
    %v289 = vsel %vm288, %v285, %v287
    %v290 = vsel %vm288, %v283, %v285
    %v291 = vsel %vm288, %v281, %v283
    %v292 = vsel %vm288, %v287, %v281
    %s293 = scalar_lea.vmem [#allocation9], 7
    %v294 = vld [vmem:[%s293] ss:$8 sm:$0xf]
    %v296 = vperm.slane %v294, 0
    %v297 = vperm.slane %v294, 1
    %v298 = vperm.slane %v294, 2
    %v299 = vperm.slane %v294, 3
    %v304 = vmul.f32 %v291, %v296
    %v305 = vmul.f32 %v290, %v297
    %v306 = vmul.f32 %v289, %v298
    %v307 = vmul.f32 %v292, %v299
    %308 = vrot.lane.b32.xlu0 %v100, 111
    %v309 = vpop.permute.xlu0 %308
    %310 = vrot.lane.b32.xlu0 %v101, 111
    %v311 = vpop.permute.xlu0 %310
    %312 = vrot.lane.b32.xlu0 %v102, 111
    %v313 = vpop.permute.xlu0 %312
    %314 = vrot.lane.b32.xlu0 %v103, 111
    %v315 = vpop.permute.xlu0 %314
    %vm316 = vcmp.lt.s32.totalorder %v117, 111
    %v317 = vsel %vm316, %v313, %v315
    %v318 = vsel %vm316, %v311, %v313
    %v319 = vsel %vm316, %v309, %v311
    %v320 = vsel %vm316, %v315, %v309
    %s321 = scalar_lea.vmem [#allocation9], 32
    %v322 = vld [vmem:[%s321] ss:$8 sm:$0xf]
    %v324 = vperm.slane %v322, 0
    %v325 = vperm.slane %v322, 1
    %v326 = vperm.slane %v322, 2
    %v327 = vperm.slane %v322, 3
    %v332 = vmul.f32 %v319, %v324
    %v333 = vmul.f32 %v318, %v325
    %v334 = vmul.f32 %v317, %v326
    %v335 = vmul.f32 %v320, %v327
    %337 = vset.pattern.permute.xlu0 0
    %338 = vperm.xlu0 %337, %v98
    %v339 = vpop.permute.xlu0 %338
    %v341 = vperm.slane %v133, 0
    %v342 = vperm.slane %v134, 0
    %v343 = vperm.slane %v135, 0
    %v344 = vperm.slane %v136, 0
    %v345 = vmul.f32 %v339, %v341
    %v346 = vmul.f32 %v339, %v342
    %v347 = vmul.f32 %v339, %v343
    %v348 = vmul.f32 %v339, %v344
    %v349 = vadd.f32 %v345, 0.0
    %v350 = vadd.f32 %v346, 0.0
    %v351 = vadd.f32 %v347, 0.0
    %v352 = vadd.f32 %v348, 0.0
    %353 = vset.pattern.permute.xlu0 1
    %354 = vperm.xlu0 %353, %v98
    %v355 = vpop.permute.xlu0 %354
    %v357 = vperm.slane %v161, 0
    %v358 = vperm.slane %v162, 0
    %v359 = vperm.slane %v163, 0
    %v360 = vperm.slane %v164, 0
    %v361 = vmul.f32 %v355, %v357
    %v362 = vmul.f32 %v355, %v358
    %v363 = vmul.f32 %v355, %v359
    %v364 = vmul.f32 %v355, %v360
    %v365 = vadd.f32 %v349, %v361
    %v366 = vadd.f32 %v350, %v362
    %v367 = vadd.f32 %v351, %v363
    %v368 = vadd.f32 %v352, %v364
    %369 = vset.pattern.permute.xlu0 2
    %370 = vperm.xlu0 %369, %v98
    %v371 = vpop.permute.xlu0 %370
    %v373 = vperm.slane %v189, 0
    %v374 = vperm.slane %v190, 0
    %v375 = vperm.slane %v191, 0
    %v376 = vperm.slane %v192, 0
    %v377 = vmul.f32 %v371, %v373
    %v378 = vmul.f32 %v371, %v374
    %v379 = vmul.f32 %v371, %v375
    %v380 = vmul.f32 %v371, %v376
    %v381 = vadd.f32 %v365, %v377
    %v382 = vadd.f32 %v366, %v378
    %v383 = vadd.f32 %v367, %v379
    %v384 = vadd.f32 %v368, %v380
    %385 = vset.pattern.permute.xlu0 3
    %386 = vperm.xlu0 %385, %v98
    %v387 = vpop.permute.xlu0 %386
    %v389 = vperm.slane %v217, 0
    %v390 = vperm.slane %v218, 0
    %v391 = vperm.slane %v219, 0
    %v392 = vperm.slane %v220, 0
    %v393 = vmul.f32 %v387, %v389
    %v394 = vmul.f32 %v387, %v390
    %v395 = vmul.f32 %v387, %v391
    %v396 = vmul.f32 %v387, %v392
    %v397 = vadd.f32 %v381, %v393
    %v398 = vadd.f32 %v382, %v394
    %v399 = vadd.f32 %v383, %v395
    %v400 = vadd.f32 %v384, %v396
    %401 = vset.pattern.permute.xlu0 4
    %402 = vperm.xlu0 %401, %v98
    %v403 = vpop.permute.xlu0 %402
    %v406 = vperm.slane %v223, 0
    %v407 = vperm.slane %v223, 1
    %v408 = vperm.slane %v223, 2
    %v409 = vperm.slane %v223, 3
    %v414 = vmul.f32 %v403, %v406
    %v415 = vmul.f32 %v403, %v407
    %v416 = vmul.f32 %v403, %v408
    %v417 = vmul.f32 %v403, %v409
    %v418 = vadd.f32 %v397, %v414
    %v419 = vadd.f32 %v398, %v415
    %v420 = vadd.f32 %v399, %v416
    %v421 = vadd.f32 %v400, %v417
    %422 = vset.pattern.permute.xlu0 5
    %423 = vperm.xlu0 %422, %v98
    %v424 = vpop.permute.xlu0 %423
    %v426 = vperm.slane %v248, 0
    %v427 = vperm.slane %v249, 0
    %v428 = vperm.slane %v250, 0
    %v429 = vperm.slane %v251, 0
    %v430 = vmul.f32 %v424, %v426
    %v431 = vmul.f32 %v424, %v427
    %v432 = vmul.f32 %v424, %v428
    %v433 = vmul.f32 %v424, %v429
    %v434 = vadd.f32 %v418, %v430
    %v435 = vadd.f32 %v419, %v431
    %v436 = vadd.f32 %v420, %v432
    %v437 = vadd.f32 %v421, %v433
    %438 = vset.pattern.permute.xlu0 6
    %439 = vperm.xlu0 %438, %v98
    %v440 = vpop.permute.xlu0 %439
    %v442 = vperm.slane %v276, 0
    %v443 = vperm.slane %v277, 0
    %v444 = vperm.slane %v278, 0
    %v445 = vperm.slane %v279, 0
    %v446 = vmul.f32 %v440, %v442
    %v447 = vmul.f32 %v440, %v443
    %v448 = vmul.f32 %v440, %v444
    %v449 = vmul.f32 %v440, %v445
    %v450 = vadd.f32 %v434, %v446
    %v451 = vadd.f32 %v435, %v447
    %v452 = vadd.f32 %v436, %v448
    %v453 = vadd.f32 %v437, %v449
    %454 = vset.pattern.permute.xlu0 7
    %455 = vperm.xlu0 %454, %v98
    %v456 = vpop.permute.xlu0 %455
    %v458 = vperm.slane %v304, 0
    %v459 = vperm.slane %v305, 0
    %v460 = vperm.slane %v306, 0
    %v461 = vperm.slane %v307, 0
    %v462 = vmul.f32 %v456, %v458
    %v463 = vmul.f32 %v456, %v459
    %v464 = vmul.f32 %v456, %v460
    %v465 = vmul.f32 %v456, %v461
    %v466 = vadd.f32 %v450, %v462
    %v467 = vadd.f32 %v451, %v463
    %v468 = vadd.f32 %v452, %v464
    %v469 = vadd.f32 %v453, %v465
    %470 = vset.pattern.permute.xlu0 8
    %471 = vperm.xlu0 %470, %v98
    %v472 = vpop.permute.xlu0 %471
    %v474 = vperm.slane %v332, 0
    %v475 = vperm.slane %v333, 0
    %v476 = vperm.slane %v334, 0
    %v477 = vperm.slane %v335, 0
    %v478 = vmul.f32 %v472, %v474
    %v479 = vmul.f32 %v472, %v475
    %v480 = vmul.f32 %v472, %v476
    %v481 = vmul.f32 %v472, %v477
    %v482 = vadd.f32 %v466, %v478
    %v483 = vadd.f32 %v467, %v479
    %v484 = vadd.f32 %v468, %v480
    %v485 = vadd.f32 %v469, %v481
    %v486 = vld [vmem:[%s5] sm:$0xff]
    %488 = vset.pattern.permute.xlu0 0
    %489 = vperm.xlu0 %488, %v486
    %v490 = vpop.permute.xlu0 %489
    %v492 = vadd.f32 %v482, %v490
    %v493 = vadd.f32 %v483, %v490
    %v494 = vadd.f32 %v484, %v490
    %v495 = vadd.f32 %v485, %v490
    %v496 = vmax.f32 %v492, 0.0
    %v497 = vmax.f32 %v493, 0.0
    %v498 = vmax.f32 %v494, 0.0
    %v499 = vmax.f32 %v495, 0.0
    %500 = vrot.lane.b32.xlu0 %v496, 17
    %v501 = vpop.permute.xlu0 %500
    %502 = vrot.lane.b32.xlu0 %v497, 17
    %v503 = vpop.permute.xlu0 %502
    %504 = vrot.lane.b32.xlu0 %v498, 17
    %v505 = vpop.permute.xlu0 %504
    %506 = vrot.lane.b32.xlu0 %v499, 17
    %v507 = vpop.permute.xlu0 %506
    %v508 = vsel %vm118, %v505, %v507
    %v509 = vsel %vm118, %v503, %v505
    %v510 = vsel %vm118, %v501, %v503
    %v511 = vsel %vm118, %v507, %v501
    %v512 = vmul.f32 %v511, %v125
    %v513 = vmul.f32 %v510, %v126
    %v514 = vmul.f32 %v509, %v127
    %v515 = vmul.f32 %v508, %v128
    %516 = vrot.lane.b32.xlu0 %v496, 16
    %v517 = vpop.permute.xlu0 %516
    %518 = vrot.lane.b32.xlu0 %v497, 16
    %v519 = vpop.permute.xlu0 %518
    %520 = vrot.lane.b32.xlu0 %v498, 16
    %v521 = vpop.permute.xlu0 %520
    %522 = vrot.lane.b32.xlu0 %v499, 16
    %v523 = vpop.permute.xlu0 %522
    %v524 = vsel %vm145, %v521, %v523
    %v525 = vsel %vm145, %v519, %v521
    %v526 = vsel %vm145, %v517, %v519
    %v527 = vsel %vm145, %v523, %v517
    %v528 = vmul.f32 %v527, %v153
    %v529 = vmul.f32 %v526, %v154
    %v530 = vmul.f32 %v525, %v155
    %v531 = vmul.f32 %v524, %v156
    %532 = vrot.lane.b32.xlu0 %v496, 15
    %v533 = vpop.permute.xlu0 %532
    %534 = vrot.lane.b32.xlu0 %v497, 15
    %v535 = vpop.permute.xlu0 %534
    %536 = vrot.lane.b32.xlu0 %v498, 15
    %v537 = vpop.permute.xlu0 %536
    %538 = vrot.lane.b32.xlu0 %v499, 15
    %v539 = vpop.permute.xlu0 %538
    %v540 = vsel %vm173, %v537, %v539
    %v541 = vsel %vm173, %v535, %v537
    %v542 = vsel %vm173, %v533, %v535
    %v543 = vsel %vm173, %v539, %v533
    %v544 = vmul.f32 %v543, %v181
    %v545 = vmul.f32 %v542, %v182
    %v546 = vmul.f32 %v541, %v183
    %v547 = vmul.f32 %v540, %v184
    %548 = vrot.lane.b32.xlu0 %v496, 1
    %v549 = vpop.permute.xlu0 %548
    %550 = vrot.lane.b32.xlu0 %v497, 1
    %v551 = vpop.permute.xlu0 %550
    %552 = vrot.lane.b32.xlu0 %v498, 1
    %v553 = vpop.permute.xlu0 %552
    %554 = vrot.lane.b32.xlu0 %v499, 1
    %v555 = vpop.permute.xlu0 %554
    %v556 = vsel %vm201, %v553, %v555
    %v557 = vsel %vm201, %v551, %v553
    %v558 = vsel %vm201, %v549, %v551
    %v559 = vsel %vm201, %v555, %v549
    %v560 = vmul.f32 %v559, %v209
    %v561 = vmul.f32 %v558, %v210
    %v562 = vmul.f32 %v557, %v211
    %v563 = vmul.f32 %v556, %v212
    %v565 = vperm.slane %v222, 0
    %v566 = vperm.slane %v222, 1
    %v567 = vperm.slane %v222, 2
    %v568 = vperm.slane %v222, 3
    %v573 = vmul.f32 %v496, %v565
    %v574 = vmul.f32 %v497, %v566
    %v575 = vmul.f32 %v498, %v567
    %v576 = vmul.f32 %v499, %v568
    %577 = vrot.lane.b32.xlu0 %v496, 127
    %v578 = vpop.permute.xlu0 %577
    %579 = vrot.lane.b32.xlu0 %v497, 127
    %v580 = vpop.permute.xlu0 %579
    %581 = vrot.lane.b32.xlu0 %v498, 127
    %v582 = vpop.permute.xlu0 %581
    %583 = vrot.lane.b32.xlu0 %v499, 127
    %v584 = vpop.permute.xlu0 %583
    %v585 = vsel %vm232, %v582, %v584
    %v586 = vsel %vm232, %v580, %v582
    %v587 = vsel %vm232, %v578, %v580
    %v588 = vsel %vm232, %v584, %v578
    %v589 = vmul.f32 %v587, %v240
    %v590 = vmul.f32 %v586, %v241
    %v591 = vmul.f32 %v585, %v242
    %v592 = vmul.f32 %v588, %v243
    %593 = vrot.lane.b32.xlu0 %v496, 113
    %v594 = vpop.permute.xlu0 %593
    %595 = vrot.lane.b32.xlu0 %v497, 113
    %v596 = vpop.permute.xlu0 %595
    %597 = vrot.lane.b32.xlu0 %v498, 113
    %v598 = vpop.permute.xlu0 %597
    %599 = vrot.lane.b32.xlu0 %v499, 113
    %v600 = vpop.permute.xlu0 %599
    %v601 = vsel %vm260, %v598, %v600
    %v602 = vsel %vm260, %v596, %v598
    %v603 = vsel %vm260, %v594, %v596
    %v604 = vsel %vm260, %v600, %v594
    %v605 = vmul.f32 %v603, %v268
    %v606 = vmul.f32 %v602, %v269
    %v607 = vmul.f32 %v601, %v270
    %v608 = vmul.f32 %v604, %v271
    %609 = vrot.lane.b32.xlu0 %v496, 112
    %v610 = vpop.permute.xlu0 %609
    %611 = vrot.lane.b32.xlu0 %v497, 112
    %v612 = vpop.permute.xlu0 %611
    %613 = vrot.lane.b32.xlu0 %v498, 112
    %v614 = vpop.permute.xlu0 %613
    %615 = vrot.lane.b32.xlu0 %v499, 112
    %v616 = vpop.permute.xlu0 %615
    %v617 = vsel %vm288, %v614, %v616
    %v618 = vsel %vm288, %v612, %v614
    %v619 = vsel %vm288, %v610, %v612
    %v620 = vsel %vm288, %v616, %v610
    %v621 = vmul.f32 %v619, %v296
    %v622 = vmul.f32 %v618, %v297
    %v623 = vmul.f32 %v617, %v298
    %v624 = vmul.f32 %v620, %v299
    %625 = vrot.lane.b32.xlu0 %v496, 111
    %v626 = vpop.permute.xlu0 %625
    %627 = vrot.lane.b32.xlu0 %v497, 111
    %v628 = vpop.permute.xlu0 %627
    %629 = vrot.lane.b32.xlu0 %v498, 111
    %v630 = vpop.permute.xlu0 %629
    %631 = vrot.lane.b32.xlu0 %v499, 111
    %v632 = vpop.permute.xlu0 %631
    %v633 = vsel %vm316, %v630, %v632
    %v634 = vsel %vm316, %v628, %v630
    %v635 = vsel %vm316, %v626, %v628
    %v636 = vsel %vm316, %v632, %v626
    %v637 = vmul.f32 %v635, %v324
    %v638 = vmul.f32 %v634, %v325
    %v639 = vmul.f32 %v633, %v326
    %v640 = vmul.f32 %v636, %v327
    %v641 = vld [vmem:[%s6] sm:$0xff]
    %v642 = vld [vmem:[%s7] sm:$0xff]
    %644 = vset.pattern.permute.xlu0 0
    %645 = vperm.xlu0 %644, %v642
    %v646 = vpop.permute.xlu0 %645
    %vm648 = vcmask 588800
    %v650 = vsel %vm648, %v641, 0
    %652 = vmatpush.msra.mxu0 0.0
    %653 = vmatpush.msra.mxu0 0.0
    %654 = vmatpush.msra.mxu0 0.0
    %655 = vmatpush.msra.mxu0 0.0
    %656 = vmatpush.msra.mxu0 0.0
    %657 = vmatpush.msra.mxu0 0.0
    %658 = vmatpush.msra.mxu0 0.0
    %659 = vmatpush.msra.mxu0 %v637
    %660 = vmatpush.msra.mxu0 %v621
    %661 = vmatpush.msra.mxu0 %v605
    %662 = vmatpush.msra.mxu0 %v589
    %663 = vmatpush.msra.mxu0 %v573
    %664 = vmatpush.msra.mxu0 %v560
    %665 = vmatpush.msra.mxu0 %v544
    %666 = vmatpush.msra.mxu0 %v528
    %667 = vmatpush.msra.mxu0 %v512
    %668 = vmatmul.f32.gmra.mxu0 %v650
    %v669 = vpop.f32.mrf.mxu0
    %v670 = vadd.f32 %v646, %v669
    %671 = vdwg.mxu0
    %672 = vmatpush.msra.mxu0 0.0
    %673 = vmatpush.msra.mxu0 0.0
    %674 = vmatpush.msra.mxu0 0.0
    %675 = vmatpush.msra.mxu0 0.0
    %676 = vmatpush.msra.mxu0 0.0
    %677 = vmatpush.msra.mxu0 0.0
    %678 = vmatpush.msra.mxu0 0.0
    %679 = vmatpush.msra.mxu0 %v638
    %680 = vmatpush.msra.mxu0 %v622
    %681 = vmatpush.msra.mxu0 %v606
    %682 = vmatpush.msra.mxu0 %v590
    %683 = vmatpush.msra.mxu0 %v574
    %684 = vmatpush.msra.mxu0 %v561
    %685 = vmatpush.msra.mxu0 %v545
    %686 = vmatpush.msra.mxu0 %v529
    %687 = vmatpush.msra.mxu0 %v513
    %688 = vmatmul.f32.gmra.mxu0 %v650
    %v689 = vpop.f32.mrf.mxu0
    %v690 = vadd.f32 %v646, %v689
    %691 = vdwg.mxu0
    %692 = vmatpush.msra.mxu0 0.0
    %693 = vmatpush.msra.mxu0 0.0
    %694 = vmatpush.msra.mxu0 0.0
    %695 = vmatpush.msra.mxu0 0.0
    %696 = vmatpush.msra.mxu0 0.0
    %697 = vmatpush.msra.mxu0 0.0
    %698 = vmatpush.msra.mxu0 0.0
    %699 = vmatpush.msra.mxu0 %v639
    %700 = vmatpush.msra.mxu0 %v623
    %701 = vmatpush.msra.mxu0 %v607
    %702 = vmatpush.msra.mxu0 %v591
    %703 = vmatpush.msra.mxu0 %v575
    %704 = vmatpush.msra.mxu0 %v562
    %705 = vmatpush.msra.mxu0 %v546
    %706 = vmatpush.msra.mxu0 %v530
    %707 = vmatpush.msra.mxu0 %v514
    %708 = vmatmul.f32.gmra.mxu0 %v650
    %v709 = vpop.f32.mrf.mxu0
    %v710 = vadd.f32 %v646, %v709
    %711 = vdwg.mxu0
    %712 = vmatpush.msra.mxu0 0.0
    %713 = vmatpush.msra.mxu0 0.0
    %714 = vmatpush.msra.mxu0 0.0
    %715 = vmatpush.msra.mxu0 0.0
    %716 = vmatpush.msra.mxu0 0.0
    %717 = vmatpush.msra.mxu0 0.0
    %718 = vmatpush.msra.mxu0 0.0
    %719 = vmatpush.msra.mxu0 %v640
    %720 = vmatpush.msra.mxu0 %v624
    %721 = vmatpush.msra.mxu0 %v608
    %722 = vmatpush.msra.mxu0 %v592
    %723 = vmatpush.msra.mxu0 %v576
    %724 = vmatpush.msra.mxu0 %v563
    %725 = vmatpush.msra.mxu0 %v547
    %726 = vmatpush.msra.mxu0 %v531
    %727 = vmatpush.msra.mxu0 %v515
    %728 = vmatmul.f32.gmra.mxu0 %v650
    %v729 = vpop.f32.mrf.mxu0
    %v730 = vadd.f32 %v646, %v729
    %731 = vdwg.mxu0
    %v732 = vmax.f32 %v670, 0.0
    %v733 = vmax.f32 %v690, 0.0
    %v734 = vmax.f32 %v710, 0.0
    %v735 = vmax.f32 %v730, 0.0
    %v736 = vld [vmem:[%s8] sm:$0xff]
    %737 = vrot.lane.b32.xlu0 %v732, 17
    %v738 = vpop.permute.xlu0 %737
    %739 = vrot.lane.b32.xlu0 %v733, 17
    %v740 = vpop.permute.xlu0 %739
    %741 = vrot.lane.b32.xlu0 %v734, 17
    %v742 = vpop.permute.xlu0 %741
    %743 = vrot.lane.b32.xlu0 %v735, 17
    %v744 = vpop.permute.xlu0 %743
    %v745 = vsel %vm118, %v742, %v744
    %v746 = vsel %vm118, %v740, %v742
    %v747 = vsel %vm118, %v738, %v740
    %v748 = vsel %vm118, %v744, %v738
    %v749 = vmul.f32 %v748, %v125
    %v750 = vmul.f32 %v747, %v126
    %v751 = vmul.f32 %v746, %v127
    %v752 = vmul.f32 %v745, %v128
    %753 = vrot.lane.b32.xlu0 %v732, 16
    %v754 = vpop.permute.xlu0 %753
    %755 = vrot.lane.b32.xlu0 %v733, 16
    %v756 = vpop.permute.xlu0 %755
    %757 = vrot.lane.b32.xlu0 %v734, 16
    %v758 = vpop.permute.xlu0 %757
    %759 = vrot.lane.b32.xlu0 %v735, 16
    %v760 = vpop.permute.xlu0 %759
    %v761 = vsel %vm145, %v758, %v760
    %v762 = vsel %vm145, %v756, %v758
    %v763 = vsel %vm145, %v754, %v756
    %v764 = vsel %vm145, %v760, %v754
    %v765 = vmul.f32 %v764, %v153
    %v766 = vmul.f32 %v763, %v154
    %v767 = vmul.f32 %v762, %v155
    %v768 = vmul.f32 %v761, %v156
    %769 = vrot.lane.b32.xlu0 %v732, 15
    %v770 = vpop.permute.xlu0 %769
    %771 = vrot.lane.b32.xlu0 %v733, 15
    %v772 = vpop.permute.xlu0 %771
    %773 = vrot.lane.b32.xlu0 %v734, 15
    %v774 = vpop.permute.xlu0 %773
    %775 = vrot.lane.b32.xlu0 %v735, 15
    %v776 = vpop.permute.xlu0 %775
    %v777 = vsel %vm173, %v774, %v776
    %v778 = vsel %vm173, %v772, %v774
    %v779 = vsel %vm173, %v770, %v772
    %v780 = vsel %vm173, %v776, %v770
    %v781 = vmul.f32 %v780, %v181
    %v782 = vmul.f32 %v779, %v182
    %v783 = vmul.f32 %v778, %v183
    %v784 = vmul.f32 %v777, %v184
    %785 = vrot.lane.b32.xlu0 %v732, 1
    %v786 = vpop.permute.xlu0 %785
    %787 = vrot.lane.b32.xlu0 %v733, 1
    %v788 = vpop.permute.xlu0 %787
    %789 = vrot.lane.b32.xlu0 %v734, 1
    %v790 = vpop.permute.xlu0 %789
    %791 = vrot.lane.b32.xlu0 %v735, 1
    %v792 = vpop.permute.xlu0 %791
    %v793 = vsel %vm201, %v790, %v792
    %v794 = vsel %vm201, %v788, %v790
    %v795 = vsel %vm201, %v786, %v788
    %v796 = vsel %vm201, %v792, %v786
    %v797 = vmul.f32 %v796, %v209
    %v798 = vmul.f32 %v795, %v210
    %v799 = vmul.f32 %v794, %v211
    %v800 = vmul.f32 %v793, %v212
    %v801 = vmul.f32 %v732, %v565
    %v802 = vmul.f32 %v733, %v566
    %v803 = vmul.f32 %v734, %v567
    %v804 = vmul.f32 %v735, %v568
    %805 = vrot.lane.b32.xlu0 %v732, 127
    %v806 = vpop.permute.xlu0 %805
    %807 = vrot.lane.b32.xlu0 %v733, 127
    %v808 = vpop.permute.xlu0 %807
    %809 = vrot.lane.b32.xlu0 %v734, 127
    %v810 = vpop.permute.xlu0 %809
    %811 = vrot.lane.b32.xlu0 %v735, 127
    %v812 = vpop.permute.xlu0 %811
    %v813 = vsel %vm232, %v810, %v812
    %v814 = vsel %vm232, %v808, %v810
    %v815 = vsel %vm232, %v806, %v808
    %v816 = vsel %vm232, %v812, %v806
    %v817 = vmul.f32 %v815, %v240
    %v818 = vmul.f32 %v814, %v241
    %v819 = vmul.f32 %v813, %v242
    %v820 = vmul.f32 %v816, %v243
    %821 = vrot.lane.b32.xlu0 %v732, 113
    %v822 = vpop.permute.xlu0 %821
    %823 = vrot.lane.b32.xlu0 %v733, 113
    %v824 = vpop.permute.xlu0 %823
    %825 = vrot.lane.b32.xlu0 %v734, 113
    %v826 = vpop.permute.xlu0 %825
    %827 = vrot.lane.b32.xlu0 %v735, 113
    %v828 = vpop.permute.xlu0 %827
    %v829 = vsel %vm260, %v826, %v828
    %v830 = vsel %vm260, %v824, %v826
    %v831 = vsel %vm260, %v822, %v824
    %v832 = vsel %vm260, %v828, %v822
    %v833 = vmul.f32 %v831, %v268
    %v834 = vmul.f32 %v830, %v269
    %v835 = vmul.f32 %v829, %v270
    %v836 = vmul.f32 %v832, %v271
    %837 = vrot.lane.b32.xlu0 %v732, 112
    %v838 = vpop.permute.xlu0 %837
    %839 = vrot.lane.b32.xlu0 %v733, 112
    %v840 = vpop.permute.xlu0 %839
    %841 = vrot.lane.b32.xlu0 %v734, 112
    %v842 = vpop.permute.xlu0 %841
    %843 = vrot.lane.b32.xlu0 %v735, 112
    %v844 = vpop.permute.xlu0 %843
    %v845 = vsel %vm288, %v842, %v844
    %v846 = vsel %vm288, %v840, %v842
    %v847 = vsel %vm288, %v838, %v840
    %v848 = vsel %vm288, %v844, %v838
    %v849 = vmul.f32 %v847, %v296
    %v850 = vmul.f32 %v846, %v297
    %v851 = vmul.f32 %v845, %v298
    %v852 = vmul.f32 %v848, %v299
    %853 = vrot.lane.b32.xlu0 %v732, 111
    %v854 = vpop.permute.xlu0 %853
    %855 = vrot.lane.b32.xlu0 %v733, 111
    %v856 = vpop.permute.xlu0 %855
    %857 = vrot.lane.b32.xlu0 %v734, 111
    %v858 = vpop.permute.xlu0 %857
    %859 = vrot.lane.b32.xlu0 %v735, 111
    %v860 = vpop.permute.xlu0 %859
    %v861 = vsel %vm316, %v858, %v860
    %v862 = vsel %vm316, %v856, %v858
    %v863 = vsel %vm316, %v854, %v856
    %v864 = vsel %vm316, %v860, %v854
    %v865 = vmul.f32 %v863, %v324
    %v866 = vmul.f32 %v862, %v325
    %v867 = vmul.f32 %v861, %v326
    %v868 = vmul.f32 %v864, %v327
    %870 = vset.pattern.permute.xlu0 0
    %871 = vperm.xlu0 %870, %v736
    %v872 = vpop.permute.xlu0 %871
    %v874 = vmul.f32 %v872, %v749
    %v875 = vmul.f32 %v872, %v750
    %v876 = vmul.f32 %v872, %v751
    %v877 = vmul.f32 %v872, %v752
    %v878 = vadd.f32 %v874, 0.0
    %v879 = vadd.f32 %v875, 0.0
    %v880 = vadd.f32 %v876, 0.0
    %v881 = vadd.f32 %v877, 0.0
    %882 = vset.pattern.permute.xlu0 1
    %883 = vperm.xlu0 %882, %v736
    %v884 = vpop.permute.xlu0 %883
    %v886 = vmul.f32 %v884, %v765
    %v887 = vmul.f32 %v884, %v766
    %v888 = vmul.f32 %v884, %v767
    %v889 = vmul.f32 %v884, %v768
    %v890 = vadd.f32 %v878, %v886
    %v891 = vadd.f32 %v879, %v887
    %v892 = vadd.f32 %v880, %v888
    %v893 = vadd.f32 %v881, %v889
    %894 = vset.pattern.permute.xlu0 2
    %895 = vperm.xlu0 %894, %v736
    %v896 = vpop.permute.xlu0 %895
    %v898 = vmul.f32 %v896, %v781
    %v899 = vmul.f32 %v896, %v782
    %v900 = vmul.f32 %v896, %v783
    %v901 = vmul.f32 %v896, %v784
    %v902 = vadd.f32 %v890, %v898
    %v903 = vadd.f32 %v891, %v899
    %v904 = vadd.f32 %v892, %v900
    %v905 = vadd.f32 %v893, %v901
    %906 = vset.pattern.permute.xlu0 3
    %907 = vperm.xlu0 %906, %v736
    %v908 = vpop.permute.xlu0 %907
    %v910 = vmul.f32 %v908, %v797
    %v911 = vmul.f32 %v908, %v798
    %v912 = vmul.f32 %v908, %v799
    %v913 = vmul.f32 %v908, %v800
    %v914 = vadd.f32 %v902, %v910
    %v915 = vadd.f32 %v903, %v911
    %v916 = vadd.f32 %v904, %v912
    %v917 = vadd.f32 %v905, %v913
    %918 = vset.pattern.permute.xlu0 4
    %919 = vperm.xlu0 %918, %v736
    %v920 = vpop.permute.xlu0 %919
    %v922 = vmul.f32 %v920, %v801
    %v923 = vmul.f32 %v920, %v802
    %v924 = vmul.f32 %v920, %v803
    %v925 = vmul.f32 %v920, %v804
    %v926 = vadd.f32 %v914, %v922
    %v927 = vadd.f32 %v915, %v923
    %v928 = vadd.f32 %v916, %v924
    %v929 = vadd.f32 %v917, %v925
    %930 = vset.pattern.permute.xlu0 5
    %931 = vperm.xlu0 %930, %v736
    %v932 = vpop.permute.xlu0 %931
    %v934 = vmul.f32 %v932, %v817
    %v935 = vmul.f32 %v932, %v818
    %v936 = vmul.f32 %v932, %v819
    %v937 = vmul.f32 %v932, %v820
    %v938 = vadd.f32 %v926, %v934
    %v939 = vadd.f32 %v927, %v935
    %v940 = vadd.f32 %v928, %v936
    %v941 = vadd.f32 %v929, %v937
    %942 = vset.pattern.permute.xlu0 6
    %943 = vperm.xlu0 %942, %v736
    %v944 = vpop.permute.xlu0 %943
    %v946 = vmul.f32 %v944, %v833
    %v947 = vmul.f32 %v944, %v834
    %v948 = vmul.f32 %v944, %v835
    %v949 = vmul.f32 %v944, %v836
    %v950 = vadd.f32 %v938, %v946
    %v951 = vadd.f32 %v939, %v947
    %v952 = vadd.f32 %v940, %v948
    %v953 = vadd.f32 %v941, %v949
    %954 = vset.pattern.permute.xlu0 7
    %955 = vperm.xlu0 %954, %v736
    %v956 = vpop.permute.xlu0 %955
    %v958 = vmul.f32 %v956, %v849
    %v959 = vmul.f32 %v956, %v850
    %v960 = vmul.f32 %v956, %v851
    %v961 = vmul.f32 %v956, %v852
    %v962 = vadd.f32 %v950, %v958
    %v963 = vadd.f32 %v951, %v959
    %v964 = vadd.f32 %v952, %v960
    %v965 = vadd.f32 %v953, %v961
    %966 = vset.pattern.permute.xlu0 8
    %967 = vperm.xlu0 %966, %v736
    %v968 = vpop.permute.xlu0 %967
    %v970 = vmul.f32 %v968, %v865
    %v971 = vmul.f32 %v968, %v866
    %v972 = vmul.f32 %v968, %v867
    %v973 = vmul.f32 %v968, %v868
    %v974 = vadd.f32 %v962, %v970
    %v975 = vadd.f32 %v963, %v971
    %v976 = vadd.f32 %v964, %v972
    %v977 = vadd.f32 %v965, %v973
    %v978 = vrot.slane %v974, 4
    %v979 = vadd.f32 %v974, %v978
    %v980 = vrot.slane %v979, 2
    %v981 = vadd.f32 %v979, %v980
    %v982 = vrot.slane %v981, 1
    %v983 = vadd.f32 %v981, %v982
    %v984 = vrot.slane %v975, 4
    %v985 = vadd.f32 %v975, %v984
    %v986 = vrot.slane %v985, 2
    %v987 = vadd.f32 %v985, %v986
    %v988 = vrot.slane %v987, 1
    %v989 = vadd.f32 %v987, %v988
    %v990 = vrot.slane %v976, 4
    %v991 = vadd.f32 %v976, %v990
    %v992 = vrot.slane %v991, 2
    %v993 = vadd.f32 %v991, %v992
    %v994 = vrot.slane %v993, 1
    %v995 = vadd.f32 %v993, %v994
    %v996 = vrot.slane %v977, 4
    %v997 = vadd.f32 %v977, %v996
    %v998 = vrot.slane %v997, 2
    %v999 = vadd.f32 %v997, %v998
    %v1000 = vrot.slane %v999, 1
    %v1001 = vadd.f32 %v999, %v1000
    %v1002 = vld [vmem:[#allocation2] sm:$0x1]
    %1004 = vset.pattern.permute.xlu0 0
    %1005 = vperm.xlu0 %1004, %v1002
    %v1006 = vpop.permute.xlu0 %1005
    %v1008 = vperm.slane %v1006, 0
    %v1009 = vadd.f32 %v983, %v1008
    %v1010 = vadd.f32 %v989, %v1008
    %v1011 = vadd.f32 %v995, %v1008
    %v1012 = vadd.f32 %v1001, %v1008
    %v1013 = vld [vmem:[#allocation8] sm:$0xf]
    %v1015 = vperm.slane %v1013, 0
    %v1016 = vperm.slane %v1013, 1
    %v1017 = vperm.slane %v1013, 2
    %v1018 = vperm.slane %v1013, 3
    %v1023 = vmul.f32 %v1009, %v1015
    %v1024 = vmul.f32 %v1010, %v1016
    %v1025 = vmul.f32 %v1011, %v1017
    %v1026 = vmul.f32 %v1012, %v1018
    %v1031 = vrot.slane %v1024, 7
    %v1032 = vrot.slane %v1025, 6
    %v1033 = vrot.slane %v1026, 5
    %vm1034 = vcmask 1040384
    %v1035 = vsel %vm1034, %v1023, %v1031
    %vm1036 = vcmask 1042434
    %v1037 = vsel %vm1036, %v1032, %v1033
    %vm1038 = vcmask 1041408
    %v1039 = vsel %vm1038, %v1035, %v1037
    %v1041 = vlaneseq
    %vm1042 = vcmp.ge.s32.totalorder %v1041, 0
    %vm1043 = vcmp.lt.s32.totalorder %v1041, 512
    %vm1044 = vmand %vm1042, %vm1043
    %1045 = vst.msk [vmem:[#allocation11] sm:$0xf] %vm1044, %v1039
    // Predicated region
    $region58: #{tpu_custom_call.1} parent=1 // pred_check
      _
    $region59: #{tpu_custom_call.1} parent=1 // pred_check_branch
      %1047 = sbr.rel (0) target = $region61
    $region60: #{tpu_custom_call.1} parent=1 // pred_region
      %1049 = vsyncadd [#allocation5], 0
      %s1051 = sshll.u32 [#allocation11], 4
      %s1052 = int_to_ptr.vmem [resolvable:$true] %s1051
      %s1053 = sshll.u32 %s10, 4
      %s1054 = int_to_ptr.hbm [resolvable:$true] %s1053
      %1056 = dma.vmem_to_hbm [thread:$0]  %s1052, 64, %s1054, [#allocation5]
    $region61: #{tpu_custom_call.1} parent=1 // pred_fallthru
      _
    // Predicated region
    $region62: #{tpu_custom_call.1} parent=1 // pred_check
      _
    $region63: #{tpu_custom_call.1} parent=1 // pred_check_branch
      %1058 = sbr.rel (0) target = $region65
    $region64: #{tpu_custom_call.1} parent=1 // pred_region
      %1060 = dma.done [#allocation5], 64
    $region65: #{tpu_custom_call.1} parent=1 // pred_fallthru
      _
    %1061 = vsyncpa [#allocation4], 1
    %1062 = vsyncpa [#allocation7], 1
    %1063 = vsyncpa [#allocation10], 1
    %1064 = vsyncpa [#allocation5], 1

</llo_original>
